<compile_context>
chip_gen: v7x
topology: tpu7x:2x2x1
jax: 0.10.0
libtpu: 0.0.40
codegen_flags: <defaults>
</compile_context>

<pallas_src>
import jax
import jax.numpy as jnp
from jax.experimental import pallas as pl
from jax.experimental.pallas import tpu as pltpu


# ---------------------------------------------------------------------------
# Kernel
# ---------------------------------------------------------------------------
def _global_attention_kernel(q_ref, ctx_ref, w_in_ref, w_out_ref,
                             out_ref, attn_ref,
                             t_sc, m_sc, l_sc, acc_sc, p_sc, mt_sc):
    # q_ref:     (TB, D)      query batch tile (compute dtype)
    # ctx_ref:   (TB, TS, D)  context tile in its NATIVE dtype (cast per tile below)
    # w_in_ref:  (D, D)       linear_in weight^T (x @ W), resident
    # w_out_ref: (2D, D)      linear_out weight^T fused [W_c ; W_q], resident
    # out_ref:   (TB, D)      weightedContext output block (written at last S step)
    # attn_ref:  (TB, S)      attention output block      (written at last S step)
    # scratch:   t_sc (TB,D) f32     linear_in(q)
    #            m_sc/l_sc (TB,1) f32 running max / denominator
    #            acc_sc (TB,D) f32    weighted-context accumulator
    #            p_sc (NS,TB,TS) f32  per-source-tile exp(scores - tile_max)
    #            mt_sc (NS,TB,1) f32  per-source-tile max
    D = q_ref.shape[-1]
    NS = p_sc.shape[0]
    TS = p_sc.shape[2]
    s_idx = pl.program_id(1)
    cdt = q_ref.dtype                                   # MXU operand dtype

    # Stream the context in its native dtype; per-tile VPU cast for the MXU path
    # (no-op when compute dtype == context dtype).
    ctx = ctx_ref[...].astype(cdt)                      # (TB, TS, D)

    @pl.when(s_idx == 0)
    def _init():
        # targetT = linear_in(input): tall (TB,D) @ (D,D) MXU matmul, f32 accumulation.
        t_sc[...] = jnp.dot(q_ref[...], w_in_ref[...],
                            preferred_element_type=jnp.float32)
        m_sc[...] = jnp.full_like(m_sc, -jnp.inf)
        l_sc[...] = jnp.zeros_like(l_sc)
        acc_sc[...] = jnp.zeros_like(acc_sc)

    # Attention scores for this source tile: batched M=1 matvec (flash pattern).
    # (If a bundle dump ever shows this serialized MXU chain exposed, switch to
    #  the VPU/XLU form jnp.sum(t[:,None,:] * ctx, -1).)
    t3 = t_sc[...].astype(cdt)[:, None, :]                            # (TB,1,D)
    s3 = jnp.einsum('tqd,tsd->tqs', t3, ctx,
                    preferred_element_type=jnp.float32)[:, 0, :]      # (TB,TS) f32

    # Online softmax bookkeeping.
    m_tile = jnp.max(s3, axis=-1, keepdims=True)                      # (TB,1)
    p_t = jnp.exp(s3 - m_tile)                                        # (TB,TS)
    p_sc[s_idx] = p_t                                                 # dynamic 1st-axis store
    mt_sc[s_idx] = m_tile

    m_prev = m_sc[...]
    m_new = jnp.maximum(m_prev, m_tile)
    alpha = jnp.exp(m_prev - m_new)                                   # rescale history
    beta = jnp.exp(m_tile - m_new)                                    # rescale this tile
    l_sc[...] = alpha * l_sc[...] + beta * jnp.sum(p_t, axis=-1, keepdims=True)

    # Weighted-context contribution of this tile: batched M=1 matvec, f32 acc.
    wc_tile = jnp.einsum('tqs,tsd->tqd', p_t.astype(cdt)[:, None, :], ctx,
                         preferred_element_type=jnp.float32)[:, 0, :]  # (TB,D)
    acc_sc[...] = alpha * acc_sc[...] + beta * wc_tile
    m_sc[...] = m_new

    @pl.when(s_idx == NS - 1)
    def _finalize():
        m_fin = m_sc[...]                    # global max per row
        inv_l = 1.0 / l_sc[...]              # exact: attention rows sum to 1
        wc = acc_sc[...] * inv_l             # (TB,D) f32

        # linear_out(cat(wc, input)) (no bias) + tanh.  Fused (2D,D) weight,
        # statically sliced into its two halves (zero-cost ref views).
        wo_c = w_out_ref[:D, :]
        wo_q = w_out_ref[D:, :]
        out = jnp.tanh(
            jnp.dot(wc.astype(cdt), wo_c, preferred_element_type=jnp.float32)
            + jnp.dot(q_ref[...], wo_q, preferred_element_type=jnp.float32))
        out_ref[...] = out.astype(out_ref.dtype)

        # Normalize and emit attention: one static, lane-dense slab per S tile
        # (NS is a trace-time constant, so this unrolls with static lane offsets).
        for si in range(NS):
            scale = jnp.exp(mt_sc[si] - m_fin) * inv_l                 # (TB,1)
            attn_ref[:, si * TS:(si + 1) * TS] = (p_sc[si] * scale).astype(attn_ref.dtype)


# ---------------------------------------------------------------------------
# VMEM-aware tile selection
# ---------------------------------------------------------------------------
def _vmem_capacity_bytes():
    try:
        return int(pltpu.get_tpu_info().vmem_capacity_bytes)
    except Exception:
        return 64 * 1024 * 1024          # conservative (v7x per-TensorCore VMEM)


def _rup(x, m):
    return -(-x // m) * m


def _buf_bytes(shape, itemsize):
    # VMEM layout padding: second-minor dim -> multiple of 8, minor -> multiple of 128.
    if len(shape) == 1:
        return _rup(shape[0], 128) * itemsize
    lead = 1
    for d in shape[:-2]:
        lead *= d
    return lead * _rup(shape[-2], 8) * _rup(shape[-1], 128) * itemsize


def _footprint_bytes(tb, ts, S, D, ctx_isz, esz, osz):
    ns = S // ts
    weights = _buf_bytes((D, D), esz) + _buf_bytes((2 * D, D), esz)      # Buffered(1)
    q_blk = 2 * _buf_bytes((tb, D), esz)                                  # double-buffered
    ctx_blk = 2 * _buf_bytes((tb, ts, D), ctx_isz)                        # dominant stream
    out_blk = 2 * (_buf_bytes((tb, D), osz) + _buf_bytes((tb, S), osz))
    scratch = (2 * _buf_bytes((tb, D), 4) + 2 * _buf_bytes((tb, 1), 4)
               + _buf_bytes((ns, tb, ts), 4) + _buf_bytes((ns, tb, 1), 4))
    return weights + q_blk + ctx_blk + out_blk + scratch


def _tile_candidates(n, cap):
    # Divisors of n that satisfy the (8,128) layout rule: multiple of 8 or the full dim.
    return [t for t in range(min(n, cap), 0, -1)
            if n % t == 0 and (t % 8 == 0 or t == n)]


def _pick_tiles(B, S, D, ctx_isz, esz, osz, vmem_budget):
    tb_list = _tile_candidates(B, 256)
    ts_list = sorted(_tile_candidates(S, S), reverse=True)

    def tb_pref(tb):
        n = B // tb
        # v7x megacore: prefer an even grid with >= 4 batch steps, then even, then >= 2.
        if n >= 4 and n % 2 == 0:
            return (0, -tb)
        if n >= 2 and n % 2 == 0:
            return (1, -tb)
        if n >= 2:
            return (2, -tb)
        return (3, -tb)

    tb_list = sorted(tb_list, key=tb_pref)

    # First pass keeps source tiles reasonably wide (>=128 lanes) to amortize the
    # per-step overhead; second pass relaxes that if VMEM is tight.
    for min_ts in (min(S, 128), 1):
        for tb in tb_list:
            for ts in ts_list:
                if ts < min_ts:
                    continue
                if _footprint_bytes(tb, ts, S, D, ctx_isz, esz, osz) <= vmem_budget:
                    return tb, ts
    # Nothing fits the budget: fall back to the smallest legal tiles.
    return min(tb_list), min(ts_list)


# ---------------------------------------------------------------------------
# Wrapper
# ---------------------------------------------------------------------------
def global_attention_dotprod(inp, context, w_in, w_out, *,
                             compute_dtype=None, block_tb=None, block_ts=None):
    """
    Luong 'dotprod' GlobalAttention forward (no mask / no coverage).

    inp:     (batch, dim)           float query
    context: (batch, sourceL, dim)  memory bank — streamed in its native dtype
    w_in:    (dim, dim)             nn.Linear(dim, dim, bias=False).weight   (out, in)
    w_out:   (dim, 2*dim)           nn.Linear(2*dim, dim, bias=False).weight (out, in)
    compute_dtype: optional MXU-operand dtype (e.g. jnp.bfloat16).  The context is
        NOT cast in the wrapper (that would double its HBM traffic); it is cast
        per tile inside the kernel.  Accumulation / softmax / tanh stay float32.
    returns: (weightedContext (batch, dim), attn (batch, sourceL))
    """
    B, D = inp.shape
    Bc, S, Dc = context.shape
    assert Bc == B and Dc == D
    assert w_in.shape == (D, D)
    assert w_out.shape == (D, 2 * D)

    out_dtype = inp.dtype
    cdt = jnp.dtype(compute_dtype) if compute_dtype is not None else jnp.dtype(inp.dtype)

    # Small operands are cast in the wrapper; the big context stream is not.
    q = inp.astype(cdt)
    w_in_t = w_in.T.astype(cdt)                 # (D, D)
    w_out_t = w_out.T.astype(cdt)               # (2D, D): rows [0:D] act on wc, [D:2D] on q

    esz = cdt.itemsize
    osz = jnp.dtype(out_dtype).itemsize
    ctx_isz = jnp.dtype(context.dtype).itemsize

    vmem_cap = _vmem_capacity_bytes()
    vmem_budget = int(0.72 * vmem_cap)          # headroom for Mosaic internal scratch
    TB, TS = _pick_tiles(B, S, D, ctx_isz, esz, osz, vmem_budget)
    if block_tb is not None:
        assert B % block_tb == 0 and (block_tb % 8 == 0 or block_tb == B)
        TB = block_tb
    if block_ts is not None:
        assert S % block_ts == 0 and (block_ts % 8 == 0 or block_ts == S)
        TS = block_ts
    NS = S // TS
    grid = (B // TB, NS)

    fp = _footprint_bytes(TB, TS, S, D, ctx_isz, esz, osz)
    vmem_limit = int(min(0.9 * vmem_cap, max(16 * 1024 * 1024, 1.5 * fp)))

    out_shapes = (
        jax.ShapeDtypeStruct((B, D), out_dtype),   # weightedContext (lane-dense)
        jax.ShapeDtypeStruct((B, S), out_dtype),   # attn            (lane-dense)
    )
    scratch_shapes = [
        pltpu.VMEM((TB, D), jnp.float32),          # t = linear_in(q)
        pltpu.VMEM((TB, 1), jnp.float32),          # running max
        pltpu.VMEM((TB, 1), jnp.float32),          # running denominator
        pltpu.VMEM((TB, D), jnp.float32),          # weighted-context accumulator
        pltpu.VMEM((NS, TB, TS), jnp.float32),     # per-tile exp(scores - tile max)
        pltpu.VMEM((NS, TB, 1), jnp.float32),      # per-tile max
    ]

    def make_call(buffer_weights_once):
        wmode = {"pipeline_mode": pl.Buffered(1)} if buffer_weights_once else {}
        grid_spec = pltpu.PrefetchScalarGridSpec(
            num_scalar_prefetch=0,
            grid=grid,
            in_specs=[
                pl.BlockSpec((TB, D), lambda b, s: (b, 0)),              # q tile
                pl.BlockSpec((TB, TS, D), lambda b, s: (b, s, 0)),       # context tile (native dtype)
                pl.BlockSpec((D, D), lambda b, s: (0, 0), **wmode),      # w_in^T, resident
                pl.BlockSpec((2 * D, D), lambda b, s: (0, 0), **wmode),  # w_out^T, resident
            ],
            out_specs=[
                pl.BlockSpec((TB, D), lambda b, s: (b, 0)),
                pl.BlockSpec((TB, S), lambda b, s: (b, 0)),
            ],
            scratch_shapes=scratch_shapes,
        )
        return pl.pallas_call(
            _global_attention_kernel,
            out_shape=out_shapes,
            grid_spec=grid_spec,
            compiler_params=pltpu.CompilerParams(
                dimension_semantics=("parallel", "arbitrary"),
                vmem_limit_bytes=vmem_limit,
            ),
        )

    try:
        wc, attn = make_call(True)(q, context, w_in_t, w_out_t)
    except Exception:
        # Fallback if this JAX build rejects single-buffered resident weights.
        wc, attn = make_call(False)(q, context, w_in_t, w_out_t)
    return wc, attn


# ---------------------------------------------------------------------------
# Pure-JAX reference (matches the PyTorch forward: dotprod, no mask/coverage)
# ---------------------------------------------------------------------------
def _reference(inp, context, w_in, w_out):
    t = inp @ w_in.T                                        # linear_in
    scores = jnp.einsum('bsd,bd->bs', context, t)           # bmm(context, targetT)
    attn = jax.nn.softmax(scores, axis=-1)
    wc = jnp.einsum('bs,bsd->bd', attn, context)            # bmm(attn3, context)
    cat = jnp.concatenate([wc, inp], axis=1)
    out = jnp.tanh(cat @ w_out.T)                           # linear_out + tanh
    return out, attn


if __name__ == "__main__":
    def run_case(batch, sourceL, dim, compute_dtype, tol, tag, block_ts=None):
        key = jax.random.PRNGKey(0)
        k1, k2, k3, k4 = jax.random.split(key, 4)

        inp = jax.random.normal(k1, (batch, dim), dtype=jnp.float32)
        context = jax.random.normal(k2, (batch, sourceL, dim), dtype=jnp.float32)

        # deterministic parameter init (PyTorch nn.Linear-style uniform bounds)
        bound_in = 1.0 / (dim ** 0.5)
        bound_out = 1.0 / ((2 * dim) ** 0.5)
        w_in = jax.random.uniform(k3, (dim, dim), jnp.float32, -bound_in, bound_in)
        w_out = jax.random.uniform(k4, (dim, 2 * dim), jnp.float32, -bound_out, bound_out)

        wc, attn = global_attention_dotprod(inp, context, w_in, w_out,
                                            compute_dtype=compute_dtype,
                                            block_ts=block_ts)
        jax.block_until_ready((wc, attn))

        wc_ref, attn_ref = _reference(inp, context, w_in, w_out)
        assert jnp.allclose(wc, wc_ref, atol=tol, rtol=tol), f"weightedContext mismatch ({tag})"
        assert jnp.allclose(attn, attn_ref, atol=tol, rtol=tol), f"attn mismatch ({tag})"

    # f32 path, single-tile grid (1,1)
    run_case(batch=2, sourceL=8, dim=32, compute_dtype=jnp.float32, tol=5e-3, tag="f32/B2")
    # f32 path, batch- and source-tiled grid (2,2) -> exercises online softmax
    run_case(batch=16, sourceL=16, dim=32, compute_dtype=jnp.float32, tol=5e-3,
             tag="f32/B16/S-tiled", block_ts=8)
    # bf16 MXU fast path (operands bf16, f32 accumulation), source-tiled
    run_case(batch=8, sourceL=16, dim=32, compute_dtype=jnp.bfloat16, tol=1e-1,
             tag="bf16/B8/S-tiled", block_ts=8)

    print("KERNEL_OK")
</pallas_src>

<mosaic_0001>
module attributes {stable_mosaic.version = 11 : i64} {
  func.func @_global_attention_kernel(%arg0: i32, %arg1: i32, %arg2: memref<2x32xf32, #tpu.memory_space<vmem>>, %arg3: memref<2x8x32xf32, #tpu.memory_space<vmem>>, %arg4: memref<32x32xf32, #tpu.memory_space<vmem>>, %arg5: memref<64x32xf32, #tpu.memory_space<vmem>>, %arg6: memref<2x32xf32, #tpu.memory_space<vmem>>, %arg7: memref<2x8xf32, #tpu.memory_space<vmem>>, %arg8: memref<2x32xf32, #tpu.memory_space<vmem>>, %arg9: memref<2x1xf32, #tpu.memory_space<vmem>>, %arg10: memref<2x1xf32, #tpu.memory_space<vmem>>, %arg11: memref<2x32xf32, #tpu.memory_space<vmem>>, %arg12: memref<1x2x8xf32, #tpu.memory_space<vmem>>, %arg13: memref<1x2x1xf32, #tpu.memory_space<vmem>>) attributes {dimension_semantics = [#tpu.dimension_semantics<parallel>, #tpu.dimension_semantics<arbitrary>], iteration_bounds = array<i64: 1, 1>, scalar_prefetch = 0 : i64, scratch_operands = 6 : i64, tpu.core_type = #tpu.core_type<tc>, window_params = [{transform_indices = @transform_0, window_bounds = array<i64: 2, 32>}, {transform_indices = @transform_1, window_bounds = array<i64: 2, 8, 32>}, {pipeline_mode = #tpu.pipeline_mode<synchronous>, transform_indices = @transform_2, window_bounds = array<i64: 32, 32>}, {pipeline_mode = #tpu.pipeline_mode<synchronous>, transform_indices = @transform_3, window_bounds = array<i64: 64, 32>}, {transform_indices = @transform_4, window_bounds = array<i64: 2, 32>}, {transform_indices = @transform_5, window_bounds = array<i64: 2, 8>}]} {
    %c0 = arith.constant 0 : index
    %c0_0 = arith.constant 0 : index
    %c0_1 = arith.constant 0 : index
    %0 = vector.load %arg3[%c0, %c0_0, %c0_1] : memref<2x8x32xf32, #tpu.memory_space<vmem>>, vector<2x8x32xf32>
    %c0_i32 = arith.constant 0 : i32
    %1 = arith.cmpi eq, %arg1, %c0_i32 : i32
    %2 = arith.extui %1 : i1 to i32
    %c0_i32_2 = arith.constant 0 : i32
    %3 = arith.cmpi ne, %2, %c0_i32_2 : i32
    scf.if %3 {
      %c0_26 = arith.constant 0 : index
      %c0_27 = arith.constant 0 : index
      %48 = vector.load %arg2[%c0_26, %c0_27] : memref<2x32xf32, #tpu.memory_space<vmem>>, vector<2x32xf32>
      %c0_28 = arith.constant 0 : index
      %c0_29 = arith.constant 0 : index
      %49 = vector.load %arg4[%c0_28, %c0_29] : memref<32x32xf32, #tpu.memory_space<vmem>>, vector<32x32xf32>
      %cst_30 = arith.constant dense<0.000000e+00> : vector<2x32xf32>
      %50 = tpu.matmul %48, %49, %cst_30 {dimension_numbers = #tpu.dot_dimension_numbers<[1], [0], [0], [1], [0, 0, 1, 1], [], []>} : vector<2x32xf32>, vector<32x32xf32>, vector<2x32xf32> -> vector<2x32xf32>
      %c0_31 = arith.constant 0 : index
      %c0_32 = arith.constant 0 : index
      %51 = vector.load %arg8[%c0_31, %c0_32] : memref<2x32xf32, #tpu.memory_space<vmem>>, vector<2x32xf32>
      tpu.vector_store %arg8[%c0_31, %c0_32], %50 {strides = array<i32>} : memref<2x32xf32, #tpu.memory_space<vmem>>, vector<2x32xf32>,
      %cst_33 = arith.constant 0xFF800000 : f32
      %52 = vector.broadcast %cst_33 : f32 to vector<2x1xf32>
      %c0_34 = arith.constant 0 : index
      %c0_35 = arith.constant 0 : index
      %53 = vector.load %arg9[%c0_34, %c0_35] : memref<2x1xf32, #tpu.memory_space<vmem>>, vector<2x1xf32>
      tpu.vector_store %arg9[%c0_34, %c0_35], %52 {strides = array<i32>} : memref<2x1xf32, #tpu.memory_space<vmem>>, vector<2x1xf32>,
      %cst_36 = arith.constant 0.000000e+00 : f32
      %54 = vector.broadcast %cst_36 : f32 to vector<2x1xf32>
      %c0_37 = arith.constant 0 : index
      %c0_38 = arith.constant 0 : index
      %55 = vector.load %arg10[%c0_37, %c0_38] : memref<2x1xf32, #tpu.memory_space<vmem>>, vector<2x1xf32>
      tpu.vector_store %arg10[%c0_37, %c0_38], %54 {strides = array<i32>} : memref<2x1xf32, #tpu.memory_space<vmem>>, vector<2x1xf32>,
      %cst_39 = arith.constant 0.000000e+00 : f32
      %56 = vector.broadcast %cst_39 : f32 to vector<2x32xf32>
      %c0_40 = arith.constant 0 : index
      %c0_41 = arith.constant 0 : index
      %57 = vector.load %arg11[%c0_40, %c0_41] : memref<2x32xf32, #tpu.memory_space<vmem>>, vector<2x32xf32>
      tpu.vector_store %arg11[%c0_40, %c0_41], %56 {strides = array<i32>} : memref<2x32xf32, #tpu.memory_space<vmem>>, vector<2x32xf32>,
    } else {
    }
    %c0_3 = arith.constant 0 : index
    %c0_4 = arith.constant 0 : index
    %4 = vector.load %arg8[%c0_3, %c0_4] : memref<2x32xf32, #tpu.memory_space<vmem>>, vector<2x32xf32>
    %5 = vector.shape_cast %4 : vector<2x32xf32> to vector<2x1x32xf32>
    "tpu.trace_start"() <{level = 10 : i32, message = "tqd,tsd->tqs"}> : () -> ()
    %cst = arith.constant dense<0.000000e+00> : vector<2x1x8xf32>
    %6 = tpu.matmul %5, %0, %cst {dimension_numbers = #tpu.dot_dimension_numbers<[2], [2], [1], [1], [0, 0, 0, 1, 1, 1], [0], [0]>} : vector<2x1x32xf32>, vector<2x8x32xf32>, vector<2x1x8xf32> -> vector<2x1x8xf32>
    "tpu.trace_stop"() : () -> ()
    %7 = vector.shape_cast %6 : vector<2x1x8xf32> to vector<2x8xf32>
    %cst_5 = arith.constant dense<0xFF800000> : vector<2xf32>
    %8 = vector.multi_reduction <maximumf>, %7, %cst_5 [1] : vector<2x8xf32> to vector<2xf32>
    %9 = vector.shape_cast %8 : vector<2xf32> to vector<2x1xf32>
    %10 = vector.broadcast %9 : vector<2x1xf32> to vector<2x8xf32>
    %11 = arith.subf %7, %10 : vector<2x8xf32>
    %12 = math.exp %11 : vector<2x8xf32>
    %13 = arith.index_cast %arg1 : i32 to index
    %c0_6 = arith.constant 0 : index
    %c0_7 = arith.constant 0 : index
    %14 = vector.load %arg12[%13, %c0_6, %c0_7] : memref<1x2x8xf32, #tpu.memory_space<vmem>>, vector<1x2x8xf32>
    %15 = vector.shape_cast %14 : vector<1x2x8xf32> to vector<2x8xf32>
    %16 = vector.shape_cast %12 : vector<2x8xf32> to vector<1x2x8xf32>
    tpu.vector_store %arg12[%13, %c0_6, %c0_7], %16 {strides = array<i32>} : memref<1x2x8xf32, #tpu.memory_space<vmem>>, vector<1x2x8xf32>,
    %17 = arith.index_cast %arg1 : i32 to index
    %c0_8 = arith.constant 0 : index
    %c0_9 = arith.constant 0 : index
    %18 = vector.load %arg13[%17, %c0_8, %c0_9] : memref<1x2x1xf32, #tpu.memory_space<vmem>>, vector<1x2x1xf32>
    %19 = vector.shape_cast %18 : vector<1x2x1xf32> to vector<2x1xf32>
    %20 = vector.shape_cast %9 : vector<2x1xf32> to vector<1x2x1xf32>
    tpu.vector_store %arg13[%17, %c0_8, %c0_9], %20 {strides = array<i32>} : memref<1x2x1xf32, #tpu.memory_space<vmem>>, vector<1x2x1xf32>,
    %c0_10 = arith.constant 0 : index
    %c0_11 = arith.constant 0 : index
    %21 = vector.load %arg9[%c0_10, %c0_11] : memref<2x1xf32, #tpu.memory_space<vmem>>, vector<2x1xf32>
    %22 = arith.maximumf %21, %9 : vector<2x1xf32>
    %23 = arith.subf %21, %22 : vector<2x1xf32>
    %24 = math.exp %23 : vector<2x1xf32>
    %25 = arith.subf %9, %22 : vector<2x1xf32>
    %26 = math.exp %25 : vector<2x1xf32>
    %c0_12 = arith.constant 0 : index
    %c0_13 = arith.constant 0 : index
    %27 = vector.load %arg10[%c0_12, %c0_13] : memref<2x1xf32, #tpu.memory_space<vmem>>, vector<2x1xf32>
    %28 = arith.mulf %24, %27 : vector<2x1xf32>
    %cst_14 = arith.constant dense<0.000000e+00> : vector<2xf32>
    %29 = vector.multi_reduction <add>, %12, %cst_14 [1] : vector<2x8xf32> to vector<2xf32>
    %30 = vector.shape_cast %29 : vector<2xf32> to vector<2x1xf32>
    %31 = arith.mulf %26, %30 : vector<2x1xf32>
    %32 = arith.addf %28, %31 : vector<2x1xf32>
    %c0_15 = arith.constant 0 : index
    %c0_16 = arith.constant 0 : index
    %33 = vector.load %arg10[%c0_15, %c0_16] : memref<2x1xf32, #tpu.memory_space<vmem>>, vector<2x1xf32>
    tpu.vector_store %arg10[%c0_15, %c0_16], %32 {strides = array<i32>} : memref<2x1xf32, #tpu.memory_space<vmem>>, vector<2x1xf32>,
    %34 = vector.shape_cast %12 : vector<2x8xf32> to vector<2x1x8xf32>
    "tpu.trace_start"() <{level = 10 : i32, message = "tqs,tsd->tqd"}> : () -> ()
    %cst_17 = arith.constant dense<0.000000e+00> : vector<2x1x32xf32>
    %35 = tpu.matmul %34, %0, %cst_17 {dimension_numbers = #tpu.dot_dimension_numbers<[2], [1], [1], [2], [0, 0, 0, 1, 1, 2], [0], [0]>} : vector<2x1x8xf32>, vector<2x8x32xf32>, vector<2x1x32xf32> -> vector<2x1x32xf32>
    "tpu.trace_stop"() : () -> ()
    %36 = vector.shape_cast %35 : vector<2x1x32xf32> to vector<2x32xf32>
    %c0_18 = arith.constant 0 : index
    %c0_19 = arith.constant 0 : index
    %37 = vector.load %arg11[%c0_18, %c0_19] : memref<2x32xf32, #tpu.memory_space<vmem>>, vector<2x32xf32>
    %38 = vector.broadcast %24 : vector<2x1xf32> to vector<2x32xf32>
    %39 = arith.mulf %38, %37 : vector<2x32xf32>
    %40 = vector.broadcast %26 : vector<2x1xf32> to vector<2x32xf32>
    %41 = arith.mulf %40, %36 : vector<2x32xf32>
    %42 = arith.addf %39, %41 : vector<2x32xf32>
    %c0_20 = arith.constant 0 : index
    %c0_21 = arith.constant 0 : index
    %43 = vector.load %arg11[%c0_20, %c0_21] : memref<2x32xf32, #tpu.memory_space<vmem>>, vector<2x32xf32>
    tpu.vector_store %arg11[%c0_20, %c0_21], %42 {strides = array<i32>} : memref<2x32xf32, #tpu.memory_space<vmem>>, vector<2x32xf32>,
    %c0_22 = arith.constant 0 : index
    %c0_23 = arith.constant 0 : index
    %44 = vector.load %arg9[%c0_22, %c0_23] : memref<2x1xf32, #tpu.memory_space<vmem>>, vector<2x1xf32>
    tpu.vector_store %arg9[%c0_22, %c0_23], %22 {strides = array<i32>} : memref<2x1xf32, #tpu.memory_space<vmem>>, vector<2x1xf32>,
    %c0_i32_24 = arith.constant 0 : i32
    %45 = arith.cmpi eq, %arg1, %c0_i32_24 : i32
    %46 = arith.extui %45 : i1 to i32
    %c0_i32_25 = arith.constant 0 : i32
    %47 = arith.cmpi ne, %46, %c0_i32_25 : i32
    scf.if %47 {
      %c0_26 = arith.constant 0 : index
      %c0_27 = arith.constant 0 : index
      %48 = vector.load %arg9[%c0_26, %c0_27] : memref<2x1xf32, #tpu.memory_space<vmem>>, vector<2x1xf32>
      %c0_28 = arith.constant 0 : index
      %c0_29 = arith.constant 0 : index
      %49 = vector.load %arg10[%c0_28, %c0_29] : memref<2x1xf32, #tpu.memory_space<vmem>>, vector<2x1xf32>
      %cst_30 = arith.constant 1.000000e+00 : f32
      %50 = vector.broadcast %cst_30 : f32 to vector<2x1xf32>
      %51 = arith.divf %50, %49 : vector<2x1xf32>
      %c0_31 = arith.constant 0 : index
      %c0_32 = arith.constant 0 : index
      %52 = vector.load %arg11[%c0_31, %c0_32] : memref<2x32xf32, #tpu.memory_space<vmem>>, vector<2x32xf32>
      %53 = vector.broadcast %51 : vector<2x1xf32> to vector<2x32xf32>
      %54 = arith.mulf %52, %53 : vector<2x32xf32>
      %c0_33 = arith.constant 0 : index
      %c0_34 = arith.constant 0 : index
      %55 = vector.load %arg5[%c0_33, %c0_34] : memref<64x32xf32, #tpu.memory_space<vmem>>, vector<32x32xf32>
      %c32 = arith.constant 32 : index
      %c0_35 = arith.constant 0 : index
      %56 = vector.load %arg5[%c32, %c0_35] : memref<64x32xf32, #tpu.memory_space<vmem>>, vector<32x32xf32>
      %cst_36 = arith.constant dense<0.000000e+00> : vector<2x32xf32>
      %57 = tpu.matmul %54, %55, %cst_36 {dimension_numbers = #tpu.dot_dimension_numbers<[1], [0], [0], [1], [0, 0, 1, 1], [], []>} : vector<2x32xf32>, vector<32x32xf32>, vector<2x32xf32> -> vector<2x32xf32>
      %c0_37 = arith.constant 0 : index
      %c0_38 = arith.constant 0 : index
      %58 = vector.load %arg2[%c0_37, %c0_38] : memref<2x32xf32, #tpu.memory_space<vmem>>, vector<2x32xf32>
      %cst_39 = arith.constant dense<0.000000e+00> : vector<2x32xf32>
      %59 = tpu.matmul %58, %56, %cst_39 {dimension_numbers = #tpu.dot_dimension_numbers<[1], [0], [0], [1], [0, 0, 1, 1], [], []>} : vector<2x32xf32>, vector<32x32xf32>, vector<2x32xf32> -> vector<2x32xf32>
      %60 = arith.addf %57, %59 : vector<2x32xf32>
      %61 = math.tanh %60 : vector<2x32xf32>
      %c0_40 = arith.constant 0 : index
      %c0_41 = arith.constant 0 : index
      %62 = vector.load %arg6[%c0_40, %c0_41] : memref<2x32xf32, #tpu.memory_space<vmem>>, vector<2x32xf32>
      tpu.vector_store %arg6[%c0_40, %c0_41], %61 {strides = array<i32>} : memref<2x32xf32, #tpu.memory_space<vmem>>, vector<2x32xf32>,
      %c0_42 = arith.constant 0 : index
      %c0_43 = arith.constant 0 : index
      %c0_44 = arith.constant 0 : index
      %63 = vector.load %arg13[%c0_42, %c0_43, %c0_44] : memref<1x2x1xf32, #tpu.memory_space<vmem>>, vector<1x2x1xf32>
      %64 = vector.shape_cast %63 : vector<1x2x1xf32> to vector<2x1xf32>
      %65 = arith.subf %64, %48 : vector<2x1xf32>
      %66 = math.exp %65 : vector<2x1xf32>
      %67 = arith.mulf %66, %51 : vector<2x1xf32>
      %c0_45 = arith.constant 0 : index
      %c0_46 = arith.constant 0 : index
      %c0_47 = arith.constant 0 : index
      %68 = vector.load %arg12[%c0_45, %c0_46, %c0_47] : memref<1x2x8xf32, #tpu.memory_space<vmem>>, vector<1x2x8xf32>
      %69 = vector.shape_cast %68 : vector<1x2x8xf32> to vector<2x8xf32>
      %70 = vector.broadcast %67 : vector<2x1xf32> to vector<2x8xf32>
      %71 = arith.mulf %69, %70 : vector<2x8xf32>
      %c0_48 = arith.constant 0 : index
      %c0_49 = arith.constant 0 : index
      %72 = vector.load %arg7[%c0_48, %c0_49] : memref<2x8xf32, #tpu.memory_space<vmem>>, vector<2x8xf32>
      tpu.vector_store %arg7[%c0_48, %c0_49], %71 {strides = array<i32>} : memref<2x8xf32, #tpu.memory_space<vmem>>, vector<2x8xf32>,
    } else {
    }
    return
  }
  func.func @transform_0(%arg0: i32, %arg1: i32) -> (i32, i32) {
    %c0_i32 = arith.constant 0 : i32
    %c0_i32_0 = arith.constant 0 : i32
    return %arg0, %c0_i32 : i32, i32
  }
  func.func @transform_1(%arg0: i32, %arg1: i32) -> (i32, i32, i32) {
    %c0_i32 = arith.constant 0 : i32
    %c0_i32_0 = arith.constant 0 : i32
    return %arg0, %arg1, %c0_i32 : i32, i32, i32
  }
  func.func @transform_2(%arg0: i32, %arg1: i32) -> (i32, i32) {
    %c0_i32 = arith.constant 0 : i32
    %c0_i32_0 = arith.constant 0 : i32
    %c0_i32_1 = arith.constant 0 : i32
    return %c0_i32, %c0_i32_0 : i32, i32
  }
  func.func @transform_3(%arg0: i32, %arg1: i32) -> (i32, i32) {
    %c0_i32 = arith.constant 0 : i32
    %c0_i32_0 = arith.constant 0 : i32
    %c0_i32_1 = arith.constant 0 : i32
    return %c0_i32, %c0_i32_0 : i32, i32
  }
  func.func @transform_4(%arg0: i32, %arg1: i32) -> (i32, i32) {
    %c0_i32 = arith.constant 0 : i32
    %c0_i32_0 = arith.constant 0 : i32
    return %arg0, %c0_i32 : i32, i32
  }
  func.func @transform_5(%arg0: i32, %arg1: i32) -> (i32, i32) {
    %c0_i32 = arith.constant 0 : i32
    %c0_i32_0 = arith.constant 0 : i32
    return %arg0, %c0_i32 : i32, i32
  }
}

module attributes {stable_mosaic.version = 11 : i64} {
  func.func @_global_attention_kernel(%arg0: i32, %arg1: i32, %arg2: memref<2x32xf32, #tpu.memory_space<vmem>>, %arg3: memref<2x8x32xf32, #tpu.memory_space<vmem>>, %arg4: memref<32x32xf32, #tpu.memory_space<vmem>>, %arg5: memref<64x32xf32, #tpu.memory_space<vmem>>, %arg6: memref<2x32xf32, #tpu.memory_space<vmem>>, %arg7: memref<2x8xf32, #tpu.memory_space<vmem>>, %arg8: memref<2x32xf32, #tpu.memory_space<vmem>>, %arg9: memref<2x1xf32, #tpu.memory_space<vmem>>, %arg10: memref<2x1xf32, #tpu.memory_space<vmem>>, %arg11: memref<2x32xf32, #tpu.memory_space<vmem>>, %arg12: memref<1x2x8xf32, #tpu.memory_space<vmem>>, %arg13: memref<1x2x1xf32, #tpu.memory_space<vmem>>) attributes {dimension_semantics = [#tpu.dimension_semantics<parallel>, #tpu.dimension_semantics<arbitrary>], iteration_bounds = array<i64: 1, 1>, scalar_prefetch = 0 : i64, scratch_operands = 6 : i64, tpu.core_type = #tpu.core_type<tc>, window_params = [{transform_indices = @transform_0, window_bounds = array<i64: 2, 32>}, {transform_indices = @transform_1, window_bounds = array<i64: 2, 8, 32>}, {pipeline_mode = #tpu.pipeline_mode<synchronous>, transform_indices = @transform_2, window_bounds = array<i64: 32, 32>}, {pipeline_mode = #tpu.pipeline_mode<synchronous>, transform_indices = @transform_3, window_bounds = array<i64: 64, 32>}, {transform_indices = @transform_4, window_bounds = array<i64: 2, 32>}, {transform_indices = @transform_5, window_bounds = array<i64: 2, 8>}]} {
    %c0 = arith.constant 0 : index
    %c0_0 = arith.constant 0 : index
    %c0_1 = arith.constant 0 : index
    %0 = vector.load %arg3[%c0, %c0_0, %c0_1] : memref<2x8x32xf32, #tpu.memory_space<vmem>>, vector<2x8x32xf32>
    %c0_i32 = arith.constant 0 : i32
    %1 = arith.cmpi eq, %arg1, %c0_i32 : i32
    %2 = arith.extui %1 : i1 to i32
    %c0_i32_2 = arith.constant 0 : i32
    %3 = arith.cmpi ne, %2, %c0_i32_2 : i32
    scf.if %3 {
      %c0_26 = arith.constant 0 : index
      %c0_27 = arith.constant 0 : index
      %48 = vector.load %arg2[%c0_26, %c0_27] : memref<2x32xf32, #tpu.memory_space<vmem>>, vector<2x32xf32>
      %c0_28 = arith.constant 0 : index
      %c0_29 = arith.constant 0 : index
      %49 = vector.load %arg4[%c0_28, %c0_29] : memref<32x32xf32, #tpu.memory_space<vmem>>, vector<32x32xf32>
      %cst_30 = arith.constant dense<0.000000e+00> : vector<2x32xf32>
      %50 = tpu.matmul %48, %49, %cst_30 {dimension_numbers = #tpu.dot_dimension_numbers<[1], [0], [0], [1], [0, 0, 1, 1], [], []>} : vector<2x32xf32>, vector<32x32xf32>, vector<2x32xf32> -> vector<2x32xf32>
      %c0_31 = arith.constant 0 : index
      %c0_32 = arith.constant 0 : index
      %51 = vector.load %arg8[%c0_31, %c0_32] : memref<2x32xf32, #tpu.memory_space<vmem>>, vector<2x32xf32>
      tpu.vector_store %arg8[%c0_31, %c0_32], %50 {strides = array<i32>} : memref<2x32xf32, #tpu.memory_space<vmem>>, vector<2x32xf32>,
      %cst_33 = arith.constant 0xFF800000 : f32
      %52 = vector.broadcast %cst_33 : f32 to vector<2x1xf32>
      %c0_34 = arith.constant 0 : index
      %c0_35 = arith.constant 0 : index
      %53 = vector.load %arg9[%c0_34, %c0_35] : memref<2x1xf32, #tpu.memory_space<vmem>>, vector<2x1xf32>
      tpu.vector_store %arg9[%c0_34, %c0_35], %52 {strides = array<i32>} : memref<2x1xf32, #tpu.memory_space<vmem>>, vector<2x1xf32>,
      %cst_36 = arith.constant 0.000000e+00 : f32
      %54 = vector.broadcast %cst_36 : f32 to vector<2x1xf32>
      %c0_37 = arith.constant 0 : index
      %c0_38 = arith.constant 0 : index
      %55 = vector.load %arg10[%c0_37, %c0_38] : memref<2x1xf32, #tpu.memory_space<vmem>>, vector<2x1xf32>
      tpu.vector_store %arg10[%c0_37, %c0_38], %54 {strides = array<i32>} : memref<2x1xf32, #tpu.memory_space<vmem>>, vector<2x1xf32>,
      %cst_39 = arith.constant 0.000000e+00 : f32
      %56 = vector.broadcast %cst_39 : f32 to vector<2x32xf32>
      %c0_40 = arith.constant 0 : index
      %c0_41 = arith.constant 0 : index
      %57 = vector.load %arg11[%c0_40, %c0_41] : memref<2x32xf32, #tpu.memory_space<vmem>>, vector<2x32xf32>
      tpu.vector_store %arg11[%c0_40, %c0_41], %56 {strides = array<i32>} : memref<2x32xf32, #tpu.memory_space<vmem>>, vector<2x32xf32>,
    } else {
    }
    %c0_3 = arith.constant 0 : index
    %c0_4 = arith.constant 0 : index
    %4 = vector.load %arg8[%c0_3, %c0_4] : memref<2x32xf32, #tpu.memory_space<vmem>>, vector<2x32xf32>
    %5 = vector.shape_cast %4 : vector<2x32xf32> to vector<2x1x32xf32>
    "tpu.trace_start"() <{level = 10 : i32, message = "tqd,tsd->tqs"}> : () -> ()
    %cst = arith.constant dense<0.000000e+00> : vector<2x1x8xf32>
    %6 = tpu.matmul %5, %0, %cst {dimension_numbers = #tpu.dot_dimension_numbers<[2], [2], [1], [1], [0, 0, 0, 1, 1, 1], [0], [0]>} : vector<2x1x32xf32>, vector<2x8x32xf32>, vector<2x1x8xf32> -> vector<2x1x8xf32>
    "tpu.trace_stop"() : () -> ()
    %7 = vector.shape_cast %6 : vector<2x1x8xf32> to vector<2x8xf32>
    %cst_5 = arith.constant dense<0xFF800000> : vector<2xf32>
    %8 = vector.multi_reduction <maximumf>, %7, %cst_5 [1] : vector<2x8xf32> to vector<2xf32>
    %9 = vector.shape_cast %8 : vector<2xf32> to vector<2x1xf32>
    %10 = vector.broadcast %9 : vector<2x1xf32> to vector<2x8xf32>
    %11 = arith.subf %7, %10 : vector<2x8xf32>
    %12 = math.exp %11 : vector<2x8xf32>
    %13 = arith.index_cast %arg1 : i32 to index
    %c0_6 = arith.constant 0 : index
    %c0_7 = arith.constant 0 : index
    %14 = vector.load %arg12[%13, %c0_6, %c0_7] : memref<1x2x8xf32, #tpu.memory_space<vmem>>, vector<1x2x8xf32>
    %15 = vector.shape_cast %14 : vector<1x2x8xf32> to vector<2x8xf32>
    %16 = vector.shape_cast %12 : vector<2x8xf32> to vector<1x2x8xf32>
    tpu.vector_store %arg12[%13, %c0_6, %c0_7], %16 {strides = array<i32>} : memref<1x2x8xf32, #tpu.memory_space<vmem>>, vector<1x2x8xf32>,
    %17 = arith.index_cast %arg1 : i32 to index
    %c0_8 = arith.constant 0 : index
    %c0_9 = arith.constant 0 : index
    %18 = vector.load %arg13[%17, %c0_8, %c0_9] : memref<1x2x1xf32, #tpu.memory_space<vmem>>, vector<1x2x1xf32>
    %19 = vector.shape_cast %18 : vector<1x2x1xf32> to vector<2x1xf32>
    %20 = vector.shape_cast %9 : vector<2x1xf32> to vector<1x2x1xf32>
    tpu.vector_store %arg13[%17, %c0_8, %c0_9], %20 {strides = array<i32>} : memref<1x2x1xf32, #tpu.memory_space<vmem>>, vector<1x2x1xf32>,
    %c0_10 = arith.constant 0 : index
    %c0_11 = arith.constant 0 : index
    %21 = vector.load %arg9[%c0_10, %c0_11] : memref<2x1xf32, #tpu.memory_space<vmem>>, vector<2x1xf32>
    %22 = arith.maximumf %21, %9 : vector<2x1xf32>
    %23 = arith.subf %21, %22 : vector<2x1xf32>
    %24 = math.exp %23 : vector<2x1xf32>
    %25 = arith.subf %9, %22 : vector<2x1xf32>
    %26 = math.exp %25 : vector<2x1xf32>
    %c0_12 = arith.constant 0 : index
    %c0_13 = arith.constant 0 : index
    %27 = vector.load %arg10[%c0_12, %c0_13] : memref<2x1xf32, #tpu.memory_space<vmem>>, vector<2x1xf32>
    %28 = arith.mulf %24, %27 : vector<2x1xf32>
    %cst_14 = arith.constant dense<0.000000e+00> : vector<2xf32>
    %29 = vector.multi_reduction <add>, %12, %cst_14 [1] : vector<2x8xf32> to vector<2xf32>
    %30 = vector.shape_cast %29 : vector<2xf32> to vector<2x1xf32>
    %31 = arith.mulf %26, %30 : vector<2x1xf32>
    %32 = arith.addf %28, %31 : vector<2x1xf32>
    %c0_15 = arith.constant 0 : index
    %c0_16 = arith.constant 0 : index
    %33 = vector.load %arg10[%c0_15, %c0_16] : memref<2x1xf32, #tpu.memory_space<vmem>>, vector<2x1xf32>
    tpu.vector_store %arg10[%c0_15, %c0_16], %32 {strides = array<i32>} : memref<2x1xf32, #tpu.memory_space<vmem>>, vector<2x1xf32>,
    %34 = vector.shape_cast %12 : vector<2x8xf32> to vector<2x1x8xf32>
    "tpu.trace_start"() <{level = 10 : i32, message = "tqs,tsd->tqd"}> : () -> ()
    %cst_17 = arith.constant dense<0.000000e+00> : vector<2x1x32xf32>
    %35 = tpu.matmul %34, %0, %cst_17 {dimension_numbers = #tpu.dot_dimension_numbers<[2], [1], [1], [2], [0, 0, 0, 1, 1, 2], [0], [0]>} : vector<2x1x8xf32>, vector<2x8x32xf32>, vector<2x1x32xf32> -> vector<2x1x32xf32>
    "tpu.trace_stop"() : () -> ()
    %36 = vector.shape_cast %35 : vector<2x1x32xf32> to vector<2x32xf32>
    %c0_18 = arith.constant 0 : index
    %c0_19 = arith.constant 0 : index
    %37 = vector.load %arg11[%c0_18, %c0_19] : memref<2x32xf32, #tpu.memory_space<vmem>>, vector<2x32xf32>
    %38 = vector.broadcast %24 : vector<2x1xf32> to vector<2x32xf32>
    %39 = arith.mulf %38, %37 : vector<2x32xf32>
    %40 = vector.broadcast %26 : vector<2x1xf32> to vector<2x32xf32>
    %41 = arith.mulf %40, %36 : vector<2x32xf32>
    %42 = arith.addf %39, %41 : vector<2x32xf32>
    %c0_20 = arith.constant 0 : index
    %c0_21 = arith.constant 0 : index
    %43 = vector.load %arg11[%c0_20, %c0_21] : memref<2x32xf32, #tpu.memory_space<vmem>>, vector<2x32xf32>
    tpu.vector_store %arg11[%c0_20, %c0_21], %42 {strides = array<i32>} : memref<2x32xf32, #tpu.memory_space<vmem>>, vector<2x32xf32>,
    %c0_22 = arith.constant 0 : index
    %c0_23 = arith.constant 0 : index
    %44 = vector.load %arg9[%c0_22, %c0_23] : memref<2x1xf32, #tpu.memory_space<vmem>>, vector<2x1xf32>
    tpu.vector_store %arg9[%c0_22, %c0_23], %22 {strides = array<i32>} : memref<2x1xf32, #tpu.memory_space<vmem>>, vector<2x1xf32>,
    %c0_i32_24 = arith.constant 0 : i32
    %45 = arith.cmpi eq, %arg1, %c0_i32_24 : i32
    %46 = arith.extui %45 : i1 to i32
    %c0_i32_25 = arith.constant 0 : i32
    %47 = arith.cmpi ne, %46, %c0_i32_25 : i32
    scf.if %47 {
      %c0_26 = arith.constant 0 : index
      %c0_27 = arith.constant 0 : index
      %48 = vector.load %arg9[%c0_26, %c0_27] : memref<2x1xf32, #tpu.memory_space<vmem>>, vector<2x1xf32>
      %c0_28 = arith.constant 0 : index
      %c0_29 = arith.constant 0 : index
      %49 = vector.load %arg10[%c0_28, %c0_29] : memref<2x1xf32, #tpu.memory_space<vmem>>, vector<2x1xf32>
      %cst_30 = arith.constant 1.000000e+00 : f32
      %50 = vector.broadcast %cst_30 : f32 to vector<2x1xf32>
      %51 = arith.divf %50, %49 : vector<2x1xf32>
      %c0_31 = arith.constant 0 : index
      %c0_32 = arith.constant 0 : index
      %52 = vector.load %arg11[%c0_31, %c0_32] : memref<2x32xf32, #tpu.memory_space<vmem>>, vector<2x32xf32>
      %53 = vector.broadcast %51 : vector<2x1xf32> to vector<2x32xf32>
      %54 = arith.mulf %52, %53 : vector<2x32xf32>
      %c0_33 = arith.constant 0 : index
      %c0_34 = arith.constant 0 : index
      %55 = vector.load %arg5[%c0_33, %c0_34] : memref<64x32xf32, #tpu.memory_space<vmem>>, vector<32x32xf32>
      %c32 = arith.constant 32 : index
      %c0_35 = arith.constant 0 : index
      %56 = vector.load %arg5[%c32, %c0_35] : memref<64x32xf32, #tpu.memory_space<vmem>>, vector<32x32xf32>
      %cst_36 = arith.constant dense<0.000000e+00> : vector<2x32xf32>
      %57 = tpu.matmul %54, %55, %cst_36 {dimension_numbers = #tpu.dot_dimension_numbers<[1], [0], [0], [1], [0, 0, 1, 1], [], []>} : vector<2x32xf32>, vector<32x32xf32>, vector<2x32xf32> -> vector<2x32xf32>
      %c0_37 = arith.constant 0 : index
      %c0_38 = arith.constant 0 : index
      %58 = vector.load %arg2[%c0_37, %c0_38] : memref<2x32xf32, #tpu.memory_space<vmem>>, vector<2x32xf32>
      %cst_39 = arith.constant dense<0.000000e+00> : vector<2x32xf32>
      %59 = tpu.matmul %58, %56, %cst_39 {dimension_numbers = #tpu.dot_dimension_numbers<[1], [0], [0], [1], [0, 0, 1, 1], [], []>} : vector<2x32xf32>, vector<32x32xf32>, vector<2x32xf32> -> vector<2x32xf32>
      %60 = arith.addf %57, %59 : vector<2x32xf32>
      %61 = math.tanh %60 : vector<2x32xf32>
      %c0_40 = arith.constant 0 : index
      %c0_41 = arith.constant 0 : index
      %62 = vector.load %arg6[%c0_40, %c0_41] : memref<2x32xf32, #tpu.memory_space<vmem>>, vector<2x32xf32>
      tpu.vector_store %arg6[%c0_40, %c0_41], %61 {strides = array<i32>} : memref<2x32xf32, #tpu.memory_space<vmem>>, vector<2x32xf32>,
      %c0_42 = arith.constant 0 : index
      %c0_43 = arith.constant 0 : index
      %c0_44 = arith.constant 0 : index
      %63 = vector.load %arg13[%c0_42, %c0_43, %c0_44] : memref<1x2x1xf32, #tpu.memory_space<vmem>>, vector<1x2x1xf32>
      %64 = vector.shape_cast %63 : vector<1x2x1xf32> to vector<2x1xf32>
      %65 = arith.subf %64, %48 : vector<2x1xf32>
      %66 = math.exp %65 : vector<2x1xf32>
      %67 = arith.mulf %66, %51 : vector<2x1xf32>
      %c0_45 = arith.constant 0 : index
      %c0_46 = arith.constant 0 : index
      %c0_47 = arith.constant 0 : index
      %68 = vector.load %arg12[%c0_45, %c0_46, %c0_47] : memref<1x2x8xf32, #tpu.memory_space<vmem>>, vector<1x2x8xf32>
      %69 = vector.shape_cast %68 : vector<1x2x8xf32> to vector<2x8xf32>
      %70 = vector.broadcast %67 : vector<2x1xf32> to vector<2x8xf32>
      %71 = arith.mulf %69, %70 : vector<2x8xf32>
      %c0_48 = arith.constant 0 : index
      %c0_49 = arith.constant 0 : index
      %72 = vector.load %arg7[%c0_48, %c0_49] : memref<2x8xf32, #tpu.memory_space<vmem>>, vector<2x8xf32>
      tpu.vector_store %arg7[%c0_48, %c0_49], %71 {strides = array<i32>} : memref<2x8xf32, #tpu.memory_space<vmem>>, vector<2x8xf32>,
    } else {
    }
    return
  }
  func.func @transform_0(%arg0: i32, %arg1: i32) -> (i32, i32) {
    %c0_i32 = arith.constant 0 : i32
    %c0_i32_0 = arith.constant 0 : i32
    return %arg0, %c0_i32 : i32, i32
  }
  func.func @transform_1(%arg0: i32, %arg1: i32) -> (i32, i32, i32) {
    %c0_i32 = arith.constant 0 : i32
    %c0_i32_0 = arith.constant 0 : i32
    return %arg0, %arg1, %c0_i32 : i32, i32, i32
  }
  func.func @transform_2(%arg0: i32, %arg1: i32) -> (i32, i32) {
    %c0_i32 = arith.constant 0 : i32
    %c0_i32_0 = arith.constant 0 : i32
    %c0_i32_1 = arith.constant 0 : i32
    return %c0_i32, %c0_i32_0 : i32, i32
  }
  func.func @transform_3(%arg0: i32, %arg1: i32) -> (i32, i32) {
    %c0_i32 = arith.constant 0 : i32
    %c0_i32_0 = arith.constant 0 : i32
    %c0_i32_1 = arith.constant 0 : i32
    return %c0_i32, %c0_i32_0 : i32, i32
  }
  func.func @transform_4(%arg0: i32, %arg1: i32) -> (i32, i32) {
    %c0_i32 = arith.constant 0 : i32
    %c0_i32_0 = arith.constant 0 : i32
    return %arg0, %c0_i32 : i32, i32
  }
  func.func @transform_5(%arg0: i32, %arg1: i32) -> (i32, i32) {
    %c0_i32 = arith.constant 0 : i32
    %c0_i32_0 = arith.constant 0 : i32
    return %arg0, %c0_i32 : i32, i32
  }
}

</mosaic_0001>

<llo_original>
// kernel: tpu_custom_call.1
$region0: #{tpu_custom_call.1}
  #allocation0 [shape = 'u32[]', space=smem, size = 0x4, offset = 0x4, fixed_abs, tag = 'smem constant byte address 0x4 - core index']
  #allocation1 [shape = 'u32[144,128]{1,0:T(1,128)}', space=vmem, size = 0x12000, scoped, tag = 'internal scratch']
  #allocation2 [shape = 'f32[2,32]{1,0:T(2,128)}', space=vmem, size = 0x400, scoped, tag = 'scratch operand']
  #allocation3 [shape = 'f32[2,1]{1,0:T(2,128)}', space=vmem, size = 0x400, scoped, tag = 'scratch operand']
  #allocation4 [shape = 'f32[2,1]{1,0:T(2,128)}', space=vmem, size = 0x400, scoped, tag = 'scratch operand']
  #allocation5 [shape = 'f32[2,32]{1,0:T(2,128)}', space=vmem, size = 0x400, scoped, tag = 'scratch operand']
  #allocation6 [shape = 'f32[1,2,8]{2,1,0:T(2,128)}', space=vmem, size = 0x400, scoped, tag = 'scratch operand']
  #allocation7 [shape = 'f32[1,2,1]{2,1,0:T(2,128)}', space=vmem, size = 0x400, scoped, tag = 'scratch operand']
  %s0 = inlined_call_operand.vmem [shape: f32[2,32], index: 0, kind: input, shape index: {}]
  %s1 = inlined_call_operand.vmem [shape: f32[2,8,32], index: 1, kind: input, shape index: {}]
  %s2 = inlined_call_operand.vmem [shape: f32[32,32], index: 2, kind: input, shape index: {}]
  %s3 = inlined_call_operand.vmem [shape: f32[64,32], index: 3, kind: input, shape index: {}]
  %s4 = inlined_call_operand.hbm [shape: f32[2,32], index: 4, kind: output, shape index: {0}]
  %s5 = inlined_call_operand.hbm [shape: f32[2,8], index: 5, kind: output, shape index: {1}]
  %6 = xla_tuple %s4, %s5
  %s7 = sld [smem:[#allocation0]]
  $region42: #{tpu_custom_call.1} parent=0
    _
  %s9 = ssub.s32 1, %s7
  %s10 = scalar_select 0, %s9, %s7
  $region1: #{tpu_custom_call.1} parent=0
    #allocation8 [shape = 'u8[1024]{0}', space=vmem, size = 0x400, scoped, tag = 'output window, operand 0, single buffered']
    #allocation9 [shape = 's32[1]{0}', space=sflag, size = 0x4, scoped, tag = 'scoped memory for tpu_custom_call.1']
    #allocation10 [shape = 'u8[1024]{0}', space=vmem, size = 0x400, scoped, tag = 'output window, operand 1, single buffered']
    #allocation11 [shape = 's32[1]{0}', space=sflag, size = 0x4, scoped, tag = 'scoped memory for tpu_custom_call.1']
    %11 = vsyncpa [#allocation9], 0
    %12 = vsyncpa [#allocation11], 0
    // Predicated region
    $region2: #{tpu_custom_call.1} parent=1 // pred_check
      _
    $region3: #{tpu_custom_call.1} parent=1 // pred_check_branch
      %14 = sbr.rel (0) target = $region5
    $region4: #{tpu_custom_call.1} parent=1 // pred_region
      _
    $region5: #{tpu_custom_call.1} parent=1 // pred_fallthru
      _
    // Predicated region
    $region6: #{tpu_custom_call.1} parent=1 // pred_check
      _
    $region7: #{tpu_custom_call.1} parent=1 // pred_check_branch
      %16 = sbr.rel (0) target = $region9
    $region8: #{tpu_custom_call.1} parent=1 // pred_region
      _
    $region9: #{tpu_custom_call.1} parent=1 // pred_fallthru
      _
    // Predicated region
    $region10: #{tpu_custom_call.1} parent=1 // pred_check
      _
    $region11: #{tpu_custom_call.1} parent=1 // pred_check_branch
      %18 = sbr.rel (0) target = $region13
    $region12: #{tpu_custom_call.1} parent=1 // pred_region
      _
    $region13: #{tpu_custom_call.1} parent=1 // pred_fallthru
      _
    // Predicated region
    $region14: #{tpu_custom_call.1} parent=1 // pred_check
      _
    $region15: #{tpu_custom_call.1} parent=1 // pred_check_branch
      %20 = sbr.rel (0) target = $region17
    $region16: #{tpu_custom_call.1} parent=1 // pred_region
      _
    $region17: #{tpu_custom_call.1} parent=1 // pred_fallthru
      _
    %v21 = vld [vmem:[%s1] sm:$0xff]
    %v22 = vld [vmem:[%s1 + $0x8] sm:$0xff]
    %p23 = scmp.eq.s32.totalorder 0, 0
    // Predicated region
    $region18: #{tpu_custom_call.1} parent=1 // pred_check
      %p24 = pneg %p23
    $region19: #{tpu_custom_call.1} parent=1 // pred_check_branch
      %26 = sbr.rel (%p24) target = $region21
    $region20: #{tpu_custom_call.1} parent=1 // pred_region
      %v27 = vld [vmem:[%s0] sm:$0x3]
      %v28 = vld [vmem:[%s2] sm:$0xff]
      %v29 = vld [vmem:[%s2 + $0x8] sm:$0xff]
      %v30 = vld [vmem:[%s2 + $0x10] sm:$0xff]
      %v31 = vld [vmem:[%s2 + $0x18] sm:$0xff]
      %vm32 = vcmask 261120
      %v34 = vsel %vm32, %v27, 0
      %36 = vmatprep.subr.mxu0 0.0
      %37 = vmatpush1.msra.mxu0 %v28
      %38 = vmatprep.subr.mxu0 0.0
      %39 = vmatpush1.msra.mxu0 %v29
      %40 = vmatprep.subr.mxu0 0.0
      %41 = vmatpush1.msra.mxu0 %v30
      %42 = vmatprep.subr.mxu0 0.0
      %43 = vmatpush1.msra.mxu0 %v31
      %44 = vmatprep.subr.mxu0 0.0
      %45 = vmatpush1.msra.mxu0 0.0
      %46 = vmatprep.subr.mxu0 0.0
      %47 = vmatpush1.msra.mxu0 0.0
      %48 = vmatprep.subr.mxu0 0.0
      %49 = vmatpush1.msra.mxu0 0.0
      %50 = vmatprep.subr.mxu0 0.0
      %51 = vmatpush1.msra.mxu0 0.0
      %52 = vmatprep.subr.mxu0 0.0
      %53 = vmatpush1.msra.mxu0 0.0
      %54 = vmatprep.subr.mxu0 0.0
      %55 = vmatpush1.msra.mxu0 0.0
      %56 = vmatprep.subr.mxu0 0.0
      %57 = vmatpush1.msra.mxu0 0.0
      %58 = vmatprep.subr.mxu0 0.0
      %59 = vmatpush1.msra.mxu0 0.0
      %60 = vmatprep.subr.mxu0 0.0
      %61 = vmatpush1.msra.mxu0 0.0
      %62 = vmatprep.subr.mxu0 0.0
      %63 = vmatpush1.msra.mxu0 0.0
      %64 = vmatprep.subr.mxu0 0.0
      %65 = vmatpush1.msra.mxu0 0.0
      %66 = vmatprep.subr.mxu0 0.0
      %67 = vmatpush1.msra.mxu0 0.0
      %68 = vmatprep.subr.mxu0 0.0
      %69 = vmatpush1.msra.mxu0 0.0
      %70 = vmatprep.subr.mxu0 0.0
      %71 = vmatpush1.msra.mxu0 0.0
      %72 = vmatprep.subr.mxu0 0.0
      %73 = vmatpush1.msra.mxu0 0.0
      %74 = vmatprep.subr.mxu0 0.0
      %75 = vmatpush1.msra.mxu0 0.0
      %76 = vmatprep.subr.mxu0 0.0
      %77 = vmatpush1.msra.mxu0 0.0
      %78 = vmatprep.subr.mxu0 0.0
      %79 = vmatpush1.msra.mxu0 0.0
      %80 = vmatprep.subr.mxu0 0.0
      %81 = vmatpush1.msra.mxu0 0.0
      %82 = vmatprep.subr.mxu0 0.0
      %83 = vmatpush1.msra.mxu0 0.0
      %84 = vmatprep.subr.mxu0 0.0
      %85 = vmatpush1.msra.mxu0 0.0
      %86 = vmatprep.subr.mxu0 0.0
      %87 = vmatpush1.msra.mxu0 0.0
      %88 = vmatprep.subr.mxu0 0.0
      %89 = vmatpush1.msra.mxu0 0.0
      %90 = vmatprep.subr.mxu0 0.0
      %91 = vmatpush1.msra.mxu0 0.0
      %92 = vmatprep.subr.mxu0 0.0
      %93 = vmatpush1.msra.mxu0 0.0
      %94 = vmatprep.subr.mxu0 0.0
      %95 = vmatpush1.msra.mxu0 0.0
      %96 = vmatprep.subr.mxu0 0.0
      %97 = vmatpush1.msra.mxu0 0.0
      %98 = vmatprep.subr.mxu0 0.0
      %99 = vmatpush1.msra.mxu0 0.0
      %100 = vmatprep.mubr.f32.mxu0 0.0
      %101 = vmatmul.mubr.f32.gmra.mrb[0].mxu0 %v34
      %v102 = vpop.f32.mrb[0].mxu0
      %v103 = vadd.f32 0.0, %v102
      %v104 = vpop.f32.mrb[0].mxu0
      %105 = vdwg.mxu0
      %vm106 = vcmask 254976
      %107 = vst.msk [vmem:[#allocation2] sm:$0x3] %vm106, %v103
      %vm108 = vcmask 1024
      %109 = vst.msk [vmem:[#allocation3] sm:$0x3] %vm108, -inf
      %110 = vst.msk [vmem:[#allocation4] sm:$0x3] %vm108, 0.0
      %111 = vst.msk [vmem:[#allocation5] sm:$0x3] %vm106, 0.0
    $region21: #{tpu_custom_call.1} parent=1 // pred_fallthru
      _
    %v112 = vld [vmem:[#allocation2] sm:$0x3]
    %v115 = vunpack.c.l.s4 1966171168
    %v116 = vunpack.c.0.s8 %v115
    %v117 = vlaneseq
    %v118 = vshrl.u32 %v117, 7
    %v119 = vsub.s32 %v116, %v118
    %v120 = vrot.slane %v112, %v119
    %v121 = vcombine.high %v120, %v120
    %v123 = vunpack.c.l.s4 1966171168
    %v124 = vunpack.c.0.s8 %v123
    %v125 = vlaneseq
    %v126 = vshrl.u32 %v125, 7
    %v127 = vsub.s32 %v124, %v126
    %v128 = vrot.slane %v120, %v127
    %v130 = vunpack.c.l.s4 1966171168
    %v131 = vunpack.c.0.s8 %v130
    %v132 = vlaneseq
    %v133 = vshrl.u32 %v132, 7
    %v134 = vsub.s32 %v131, %v133
    %v135 = vrot.slane %v121, %v134
    %vm136 = vcmask 261120
    %v137 = vsel %vm136, %v128, 0
    %v140 = vsel %vm136, %v21, 0
    %142 = vmatprep.subr.mxu0 0.0
    %143 = vmatpush1.xpose.msra.mxu0 %v140
    %144 = vmatprep.subr.mxu0 0.0
    %145 = vmatpush1.xpose.msra.mxu0 0.0
    %146 = vmatprep.subr.mxu0 0.0
    %147 = vmatpush1.xpose.msra.mxu0 0.0
    %148 = vmatprep.subr.mxu0 0.0
    %149 = vmatpush1.xpose.msra.mxu0 0.0
    %150 = vmatprep.subr.mxu0 0.0
    %151 = vmatpush1.xpose.msra.mxu0 0.0
    %152 = vmatprep.subr.mxu0 0.0
    %153 = vmatpush1.xpose.msra.mxu0 0.0
    %154 = vmatprep.subr.mxu0 0.0
    %155 = vmatpush1.xpose.msra.mxu0 0.0
    %156 = vmatprep.subr.mxu0 0.0
    %157 = vmatpush1.xpose.msra.mxu0 0.0
    %158 = vmatprep.subr.mxu0 0.0
    %159 = vmatpush1.xpose.msra.mxu0 0.0
    %160 = vmatprep.subr.mxu0 0.0
    %161 = vmatpush1.xpose.msra.mxu0 0.0
    %162 = vmatprep.subr.mxu0 0.0
    %163 = vmatpush1.xpose.msra.mxu0 0.0
    %164 = vmatprep.subr.mxu0 0.0
    %165 = vmatpush1.xpose.msra.mxu0 0.0
    %166 = vmatprep.subr.mxu0 0.0
    %167 = vmatpush1.xpose.msra.mxu0 0.0
    %168 = vmatprep.subr.mxu0 0.0
    %169 = vmatpush1.xpose.msra.mxu0 0.0
    %170 = vmatprep.subr.mxu0 0.0
    %171 = vmatpush1.xpose.msra.mxu0 0.0
    %172 = vmatprep.subr.mxu0 0.0
    %173 = vmatpush1.xpose.msra.mxu0 0.0
    %174 = vmatprep.subr.mxu0 0.0
    %175 = vmatpush1.xpose.msra.mxu0 0.0
    %176 = vmatprep.subr.mxu0 0.0
    %177 = vmatpush1.xpose.msra.mxu0 0.0
    %178 = vmatprep.subr.mxu0 0.0
    %179 = vmatpush1.xpose.msra.mxu0 0.0
    %180 = vmatprep.subr.mxu0 0.0
    %181 = vmatpush1.xpose.msra.mxu0 0.0
    %182 = vmatprep.subr.mxu0 0.0
    %183 = vmatpush1.xpose.msra.mxu0 0.0
    %184 = vmatprep.subr.mxu0 0.0
    %185 = vmatpush1.xpose.msra.mxu0 0.0
    %186 = vmatprep.subr.mxu0 0.0
    %187 = vmatpush1.xpose.msra.mxu0 0.0
    %188 = vmatprep.subr.mxu0 0.0
    %189 = vmatpush1.xpose.msra.mxu0 0.0
    %190 = vmatprep.subr.mxu0 0.0
    %191 = vmatpush1.xpose.msra.mxu0 0.0
    %192 = vmatprep.subr.mxu0 0.0
    %193 = vmatpush1.xpose.msra.mxu0 0.0
    %194 = vmatprep.subr.mxu0 0.0
    %195 = vmatpush1.xpose.msra.mxu0 0.0
    %196 = vmatprep.subr.mxu0 0.0
    %197 = vmatpush1.xpose.msra.mxu0 0.0
    %198 = vmatprep.subr.mxu0 0.0
    %199 = vmatpush1.xpose.msra.mxu0 0.0
    %200 = vmatprep.subr.mxu0 0.0
    %201 = vmatpush1.xpose.msra.mxu0 0.0
    %202 = vmatprep.subr.mxu0 0.0
    %203 = vmatpush1.xpose.msra.mxu0 0.0
    %204 = vmatprep.subr.mxu0 0.0
    %205 = vmatpush1.xpose.msra.mxu0 0.0
    %206 = vmatprep.mubr.f32.mxu0 0.0
    %207 = vmatmul.mubr.f32.gmra.mrb[0].mxu0 %v137
    %v208 = vpop.f32.mrb[0].mxu0
    %v209 = vadd.f32 0.0, %v208
    %v210 = vpop.f32.mrb[0].mxu0
    %211 = vdwg.mxu0
    %v212 = vsel %vm136, %v135, 0
    %v215 = vsel %vm136, %v22, 0
    %217 = vmatprep.subr.mxu0 0.0
    %218 = vmatpush1.xpose.msra.mxu0 %v215
    %219 = vmatprep.subr.mxu0 0.0
    %220 = vmatpush1.xpose.msra.mxu0 0.0
    %221 = vmatprep.subr.mxu0 0.0
    %222 = vmatpush1.xpose.msra.mxu0 0.0
    %223 = vmatprep.subr.mxu0 0.0
    %224 = vmatpush1.xpose.msra.mxu0 0.0
    %225 = vmatprep.subr.mxu0 0.0
    %226 = vmatpush1.xpose.msra.mxu0 0.0
    %227 = vmatprep.subr.mxu0 0.0
    %228 = vmatpush1.xpose.msra.mxu0 0.0
    %229 = vmatprep.subr.mxu0 0.0
    %230 = vmatpush1.xpose.msra.mxu0 0.0
    %231 = vmatprep.subr.mxu0 0.0
    %232 = vmatpush1.xpose.msra.mxu0 0.0
    %233 = vmatprep.subr.mxu0 0.0
    %234 = vmatpush1.xpose.msra.mxu0 0.0
    %235 = vmatprep.subr.mxu0 0.0
    %236 = vmatpush1.xpose.msra.mxu0 0.0
    %237 = vmatprep.subr.mxu0 0.0
    %238 = vmatpush1.xpose.msra.mxu0 0.0
    %239 = vmatprep.subr.mxu0 0.0
    %240 = vmatpush1.xpose.msra.mxu0 0.0
    %241 = vmatprep.subr.mxu0 0.0
    %242 = vmatpush1.xpose.msra.mxu0 0.0
    %243 = vmatprep.subr.mxu0 0.0
    %244 = vmatpush1.xpose.msra.mxu0 0.0
    %245 = vmatprep.subr.mxu0 0.0
    %246 = vmatpush1.xpose.msra.mxu0 0.0
    %247 = vmatprep.subr.mxu0 0.0
    %248 = vmatpush1.xpose.msra.mxu0 0.0
    %249 = vmatprep.subr.mxu0 0.0
    %250 = vmatpush1.xpose.msra.mxu0 0.0
    %251 = vmatprep.subr.mxu0 0.0
    %252 = vmatpush1.xpose.msra.mxu0 0.0
    %253 = vmatprep.subr.mxu0 0.0
    %254 = vmatpush1.xpose.msra.mxu0 0.0
    %255 = vmatprep.subr.mxu0 0.0
    %256 = vmatpush1.xpose.msra.mxu0 0.0
    %257 = vmatprep.subr.mxu0 0.0
    %258 = vmatpush1.xpose.msra.mxu0 0.0
    %259 = vmatprep.subr.mxu0 0.0
    %260 = vmatpush1.xpose.msra.mxu0 0.0
    %261 = vmatprep.subr.mxu0 0.0
    %262 = vmatpush1.xpose.msra.mxu0 0.0
    %263 = vmatprep.subr.mxu0 0.0
    %264 = vmatpush1.xpose.msra.mxu0 0.0
    %265 = vmatprep.subr.mxu0 0.0
    %266 = vmatpush1.xpose.msra.mxu0 0.0
    %267 = vmatprep.subr.mxu0 0.0
    %268 = vmatpush1.xpose.msra.mxu0 0.0
    %269 = vmatprep.subr.mxu0 0.0
    %270 = vmatpush1.xpose.msra.mxu0 0.0
    %271 = vmatprep.subr.mxu0 0.0
    %272 = vmatpush1.xpose.msra.mxu0 0.0
    %273 = vmatprep.subr.mxu0 0.0
    %274 = vmatpush1.xpose.msra.mxu0 0.0
    %275 = vmatprep.subr.mxu0 0.0
    %276 = vmatpush1.xpose.msra.mxu0 0.0
    %277 = vmatprep.subr.mxu0 0.0
    %278 = vmatpush1.xpose.msra.mxu0 0.0
    %279 = vmatprep.subr.mxu0 0.0
    %280 = vmatpush1.xpose.msra.mxu0 0.0
    %281 = vmatprep.mubr.f32.mxu0 0.0
    %282 = vmatmul.mubr.f32.gmra.mrb[0].mxu0 %v212
    %v283 = vpop.f32.mrb[0].mxu0
    %v284 = vadd.f32 0.0, %v283
    %v285 = vpop.f32.mrb[0].mxu0
    %286 = vdwg.mxu0
    %v289 = vrot.slane %v284, 7
    %vm290 = vcmask 1041409
    %v291 = vsel %vm290, %v289, %v209
    %vm293 = vcmask 58368
    %v294 = vsel %vm293, %v291, -inf
    %295 = vmax.xlane.f32.xlu0 %v294
    %v296 = vpop.xlane.xlu0 %295
    %v298 = vrot.slane %v296, 1
    %v301 = vsub.f32 %v209, %v296
    %v302 = vsub.f32 %v284, %v298
    %v303 = vmul.f32 %v301, 1.442695
    %v304 = vpow.pop %v303
    %v305 = vmul.f32 %v302, 1.442695
    %v306 = vpow.pop %v305
    %v309 = vrot.slane %v306, 7
    %v310 = vsel %vm290, %v309, %v304
    %s312 = smul.u32 0, 2
    %s313 = scalar_lea.vmem [#allocation6], %s312
    %314 = vst.msk [vmem:[%s313] sm:$0x3] %vm293, %v310
    %s315 = scalar_lea.vmem [#allocation7], %s312
    %vm316 = vcmask 1024
    %317 = vst.msk [vmem:[%s315] sm:$0x3] %vm316, %v296
    %v318 = vld [vmem:[#allocation3] sm:$0x3]
    %v319 = vmax.f32 %v318, %v296
    %v320 = vsub.f32 %v318, %v319
    %v321 = vmul.f32 %v320, 1.442695
    %v322 = vpow.pop %v321
    %v323 = vsub.f32 %v296, %v319
    %v324 = vmul.f32 %v323, 1.442695
    %v325 = vpow.pop %v324
    %v326 = vld [vmem:[#allocation4] sm:$0x3]
    %v327 = vmul.f32 %v322, %v326
    %v328 = vsel %vm293, %v310, 0.0
    %329 = vadd.xlane.f32.xlu0 %v328
    %v330 = vpop.xlane.xlu0 %329
    %v331 = vmul.f32 %v325, %v330
    %v332 = vadd.f32 %v327, %v331
    %333 = vst.msk [vmem:[#allocation4] sm:$0x3] %vm316, %v332
    %vm334 = vcmask 64512
    %v335 = vsel %vm334, %v304, 0
    %337 = vmatprep.subr.mxu0 0.0
    %338 = vmatpush1.msra.mxu0 %v21
    %339 = vmatprep.subr.mxu0 0.0
    %340 = vmatpush1.msra.mxu0 0.0
    %341 = vmatprep.subr.mxu0 0.0
    %342 = vmatpush1.msra.mxu0 0.0
    %343 = vmatprep.subr.mxu0 0.0
    %344 = vmatpush1.msra.mxu0 0.0
    %345 = vmatprep.subr.mxu0 0.0
    %346 = vmatpush1.msra.mxu0 0.0
    %347 = vmatprep.subr.mxu0 0.0
    %348 = vmatpush1.msra.mxu0 0.0
    %349 = vmatprep.subr.mxu0 0.0
    %350 = vmatpush1.msra.mxu0 0.0
    %351 = vmatprep.subr.mxu0 0.0
    %352 = vmatpush1.msra.mxu0 0.0
    %353 = vmatprep.subr.mxu0 0.0
    %354 = vmatpush1.msra.mxu0 0.0
    %355 = vmatprep.subr.mxu0 0.0
    %356 = vmatpush1.msra.mxu0 0.0
    %357 = vmatprep.subr.mxu0 0.0
    %358 = vmatpush1.msra.mxu0 0.0
    %359 = vmatprep.subr.mxu0 0.0
    %360 = vmatpush1.msra.mxu0 0.0
    %361 = vmatprep.subr.mxu0 0.0
    %362 = vmatpush1.msra.mxu0 0.0
    %363 = vmatprep.subr.mxu0 0.0
    %364 = vmatpush1.msra.mxu0 0.0
    %365 = vmatprep.subr.mxu0 0.0
    %366 = vmatpush1.msra.mxu0 0.0
    %367 = vmatprep.subr.mxu0 0.0
    %368 = vmatpush1.msra.mxu0 0.0
    %369 = vmatprep.subr.mxu0 0.0
    %370 = vmatpush1.msra.mxu0 0.0
    %371 = vmatprep.subr.mxu0 0.0
    %372 = vmatpush1.msra.mxu0 0.0
    %373 = vmatprep.subr.mxu0 0.0
    %374 = vmatpush1.msra.mxu0 0.0
    %375 = vmatprep.subr.mxu0 0.0
    %376 = vmatpush1.msra.mxu0 0.0
    %377 = vmatprep.subr.mxu0 0.0
    %378 = vmatpush1.msra.mxu0 0.0
    %379 = vmatprep.subr.mxu0 0.0
    %380 = vmatpush1.msra.mxu0 0.0
    %381 = vmatprep.subr.mxu0 0.0
    %382 = vmatpush1.msra.mxu0 0.0
    %383 = vmatprep.subr.mxu0 0.0
    %384 = vmatpush1.msra.mxu0 0.0
    %385 = vmatprep.subr.mxu0 0.0
    %386 = vmatpush1.msra.mxu0 0.0
    %387 = vmatprep.subr.mxu0 0.0
    %388 = vmatpush1.msra.mxu0 0.0
    %389 = vmatprep.subr.mxu0 0.0
    %390 = vmatpush1.msra.mxu0 0.0
    %391 = vmatprep.subr.mxu0 0.0
    %392 = vmatpush1.msra.mxu0 0.0
    %393 = vmatprep.subr.mxu0 0.0
    %394 = vmatpush1.msra.mxu0 0.0
    %395 = vmatprep.subr.mxu0 0.0
    %396 = vmatpush1.msra.mxu0 0.0
    %397 = vmatprep.subr.mxu0 0.0
    %398 = vmatpush1.msra.mxu0 0.0
    %399 = vmatprep.subr.mxu0 0.0
    %400 = vmatpush1.msra.mxu0 0.0
    %401 = vmatprep.mubr.f32.mxu0 0.0
    %402 = vmatmul.mubr.f32.gmra.mrb[0].mxu0 %v335
    %v403 = vpop.f32.mrb[0].mxu0
    %v404 = vadd.f32 0.0, %v403
    %v405 = vpop.f32.mrb[0].mxu0
    %406 = vdwg.mxu0
    %v407 = vsel %vm334, %v306, 0
    %409 = vmatprep.subr.mxu0 0.0
    %410 = vmatpush1.msra.mxu0 %v22
    %411 = vmatprep.subr.mxu0 0.0
    %412 = vmatpush1.msra.mxu0 0.0
    %413 = vmatprep.subr.mxu0 0.0
    %414 = vmatpush1.msra.mxu0 0.0
    %415 = vmatprep.subr.mxu0 0.0
    %416 = vmatpush1.msra.mxu0 0.0
    %417 = vmatprep.subr.mxu0 0.0
    %418 = vmatpush1.msra.mxu0 0.0
    %419 = vmatprep.subr.mxu0 0.0
    %420 = vmatpush1.msra.mxu0 0.0
    %421 = vmatprep.subr.mxu0 0.0
    %422 = vmatpush1.msra.mxu0 0.0
    %423 = vmatprep.subr.mxu0 0.0
    %424 = vmatpush1.msra.mxu0 0.0
    %425 = vmatprep.subr.mxu0 0.0
    %426 = vmatpush1.msra.mxu0 0.0
    %427 = vmatprep.subr.mxu0 0.0
    %428 = vmatpush1.msra.mxu0 0.0
    %429 = vmatprep.subr.mxu0 0.0
    %430 = vmatpush1.msra.mxu0 0.0
    %431 = vmatprep.subr.mxu0 0.0
    %432 = vmatpush1.msra.mxu0 0.0
    %433 = vmatprep.subr.mxu0 0.0
    %434 = vmatpush1.msra.mxu0 0.0
    %435 = vmatprep.subr.mxu0 0.0
    %436 = vmatpush1.msra.mxu0 0.0
    %437 = vmatprep.subr.mxu0 0.0
    %438 = vmatpush1.msra.mxu0 0.0
    %439 = vmatprep.subr.mxu0 0.0
    %440 = vmatpush1.msra.mxu0 0.0
    %441 = vmatprep.subr.mxu0 0.0
    %442 = vmatpush1.msra.mxu0 0.0
    %443 = vmatprep.subr.mxu0 0.0
    %444 = vmatpush1.msra.mxu0 0.0
    %445 = vmatprep.subr.mxu0 0.0
    %446 = vmatpush1.msra.mxu0 0.0
    %447 = vmatprep.subr.mxu0 0.0
    %448 = vmatpush1.msra.mxu0 0.0
    %449 = vmatprep.subr.mxu0 0.0
    %450 = vmatpush1.msra.mxu0 0.0
    %451 = vmatprep.subr.mxu0 0.0
    %452 = vmatpush1.msra.mxu0 0.0
    %453 = vmatprep.subr.mxu0 0.0
    %454 = vmatpush1.msra.mxu0 0.0
    %455 = vmatprep.subr.mxu0 0.0
    %456 = vmatpush1.msra.mxu0 0.0
    %457 = vmatprep.subr.mxu0 0.0
    %458 = vmatpush1.msra.mxu0 0.0
    %459 = vmatprep.subr.mxu0 0.0
    %460 = vmatpush1.msra.mxu0 0.0
    %461 = vmatprep.subr.mxu0 0.0
    %462 = vmatpush1.msra.mxu0 0.0
    %463 = vmatprep.subr.mxu0 0.0
    %464 = vmatpush1.msra.mxu0 0.0
    %465 = vmatprep.subr.mxu0 0.0
    %466 = vmatpush1.msra.mxu0 0.0
    %467 = vmatprep.subr.mxu0 0.0
    %468 = vmatpush1.msra.mxu0 0.0
    %469 = vmatprep.subr.mxu0 0.0
    %470 = vmatpush1.msra.mxu0 0.0
    %471 = vmatprep.subr.mxu0 0.0
    %472 = vmatpush1.msra.mxu0 0.0
    %473 = vmatprep.mubr.f32.mxu0 0.0
    %474 = vmatmul.mubr.f32.gmra.mrb[0].mxu0 %v407
    %v475 = vpop.f32.mrb[0].mxu0
    %v476 = vadd.f32 0.0, %v475
    %v477 = vpop.f32.mrb[0].mxu0
    %478 = vdwg.mxu0
    %v479 = vld [vmem:[#allocation5] sm:$0x3]
    %481 = vset.pattern.permute.xlu0 0
    %482 = vperm.xlu0 %481, %v322
    %v483 = vpop.permute.xlu0 %482
    %v485 = vmul.f32 %v483, %v479
    %487 = vset.pattern.permute.xlu0 0
    %488 = vperm.xlu0 %487, %v325
    %v489 = vpop.permute.xlu0 %488
    %v493 = vrot.slane %v476, 7
    %v494 = vsel %vm290, %v493, %v404
    %v496 = vmul.f32 %v489, %v494
    %v497 = vadd.f32 %v485, %v496
    %vm498 = vcmask 254976
    %499 = vst.msk [vmem:[#allocation5] sm:$0x3] %vm498, %v497
    %500 = vst.msk [vmem:[#allocation3] sm:$0x3] %vm316, %v319
    // Predicated region
    $region22: #{tpu_custom_call.1} parent=1 // pred_check
      %p501 = pneg %p23
    $region23: #{tpu_custom_call.1} parent=1 // pred_check_branch
      %503 = sbr.rel (%p501) target = $region25
    $region24: #{tpu_custom_call.1} parent=1 // pred_region
      %v504 = vld [vmem:[#allocation3] sm:$0x3]
      %v505 = vld [vmem:[#allocation4] sm:$0x3]
      %v506 = vrcp.pop %v505
      %v507 = vmul.f32 1.0, %v506
      %v508 = vld [vmem:[#allocation5] sm:$0x3]
      %510 = vset.pattern.permute.xlu0 0
      %511 = vperm.xlu0 %510, %v507
      %v512 = vpop.permute.xlu0 %511
      %v514 = vmul.f32 %v508, %v512
      %v515 = vld [vmem:[%s3] sm:$0xff]
      %v516 = vld [vmem:[%s3 + $0x8] sm:$0xff]
      %v517 = vld [vmem:[%s3 + $0x10] sm:$0xff]
      %v518 = vld [vmem:[%s3 + $0x18] sm:$0xff]
      %v519 = vld [vmem:[%s3 + $0x20] sm:$0xff]
      %v520 = vld [vmem:[%s3 + $0x28] sm:$0xff]
      %v521 = vld [vmem:[%s3 + $0x30] sm:$0xff]
      %v522 = vld [vmem:[%s3 + $0x38] sm:$0xff]
      %v523 = vld [vmem:[%s0] sm:$0x3]
      %v525 = vsel %vm136, %v523, 0
      %527 = vmatprep.subr.mxu0 0.0
      %528 = vmatpush1.msra.mxu0 %v519
      %529 = vmatprep.subr.mxu0 0.0
      %530 = vmatpush1.msra.mxu0 %v520
      %531 = vmatprep.subr.mxu0 0.0
      %532 = vmatpush1.msra.mxu0 %v521
      %533 = vmatprep.subr.mxu0 0.0
      %534 = vmatpush1.msra.mxu0 %v522
      %535 = vmatprep.subr.mxu0 0.0
      %536 = vmatpush1.msra.mxu0 0.0
      %537 = vmatprep.subr.mxu0 0.0
      %538 = vmatpush1.msra.mxu0 0.0
      %539 = vmatprep.subr.mxu0 0.0
      %540 = vmatpush1.msra.mxu0 0.0
      %541 = vmatprep.subr.mxu0 0.0
      %542 = vmatpush1.msra.mxu0 0.0
      %543 = vmatprep.subr.mxu0 0.0
      %544 = vmatpush1.msra.mxu0 0.0
      %545 = vmatprep.subr.mxu0 0.0
      %546 = vmatpush1.msra.mxu0 0.0
      %547 = vmatprep.subr.mxu0 0.0
      %548 = vmatpush1.msra.mxu0 0.0
      %549 = vmatprep.subr.mxu0 0.0
      %550 = vmatpush1.msra.mxu0 0.0
      %551 = vmatprep.subr.mxu0 0.0
      %552 = vmatpush1.msra.mxu0 0.0
      %553 = vmatprep.subr.mxu0 0.0
      %554 = vmatpush1.msra.mxu0 0.0
      %555 = vmatprep.subr.mxu0 0.0
      %556 = vmatpush1.msra.mxu0 0.0
      %557 = vmatprep.subr.mxu0 0.0
      %558 = vmatpush1.msra.mxu0 0.0
      %559 = vmatprep.subr.mxu0 0.0
      %560 = vmatpush1.msra.mxu0 0.0
      %561 = vmatprep.subr.mxu0 0.0
      %562 = vmatpush1.msra.mxu0 0.0
      %563 = vmatprep.subr.mxu0 0.0
      %564 = vmatpush1.msra.mxu0 0.0
      %565 = vmatprep.subr.mxu0 0.0
      %566 = vmatpush1.msra.mxu0 0.0
      %567 = vmatprep.subr.mxu0 0.0
      %568 = vmatpush1.msra.mxu0 0.0
      %569 = vmatprep.subr.mxu0 0.0
      %570 = vmatpush1.msra.mxu0 0.0
      %571 = vmatprep.subr.mxu0 0.0
      %572 = vmatpush1.msra.mxu0 0.0
      %573 = vmatprep.subr.mxu0 0.0
      %574 = vmatpush1.msra.mxu0 0.0
      %575 = vmatprep.subr.mxu0 0.0
      %576 = vmatpush1.msra.mxu0 0.0
      %577 = vmatprep.subr.mxu0 0.0
      %578 = vmatpush1.msra.mxu0 0.0
      %579 = vmatprep.subr.mxu0 0.0
      %580 = vmatpush1.msra.mxu0 0.0
      %581 = vmatprep.subr.mxu0 0.0
      %582 = vmatpush1.msra.mxu0 0.0
      %583 = vmatprep.subr.mxu0 0.0
      %584 = vmatpush1.msra.mxu0 0.0
      %585 = vmatprep.subr.mxu0 0.0
      %586 = vmatpush1.msra.mxu0 0.0
      %587 = vmatprep.subr.mxu0 0.0
      %588 = vmatpush1.msra.mxu0 0.0
      %589 = vmatprep.subr.mxu0 0.0
      %590 = vmatpush1.msra.mxu0 0.0
      %591 = vmatprep.mubr.f32.mxu0 0.0
      %592 = vmatmul.mubr.f32.gmra.mrb[0].mxu0 %v525
      %v593 = vpop.f32.mrb[0].mxu0
      %v594 = vadd.f32 0.0, %v593
      %v595 = vpop.f32.mrb[0].mxu0
      %596 = vdwg.mxu0
      %v598 = vsel %vm136, %v514, 0
      %600 = vmatprep.subr.mxu0 0.0
      %601 = vmatpush1.msra.mxu0 %v515
      %602 = vmatprep.subr.mxu0 0.0
      %603 = vmatpush1.msra.mxu0 %v516
      %604 = vmatprep.subr.mxu0 0.0
      %605 = vmatpush1.msra.mxu0 %v517
      %606 = vmatprep.subr.mxu0 0.0
      %607 = vmatpush1.msra.mxu0 %v518
      %608 = vmatprep.subr.mxu0 0.0
      %609 = vmatpush1.msra.mxu0 0.0
      %610 = vmatprep.subr.mxu0 0.0
      %611 = vmatpush1.msra.mxu0 0.0
      %612 = vmatprep.subr.mxu0 0.0
      %613 = vmatpush1.msra.mxu0 0.0
      %614 = vmatprep.subr.mxu0 0.0
      %615 = vmatpush1.msra.mxu0 0.0
      %616 = vmatprep.subr.mxu0 0.0
      %617 = vmatpush1.msra.mxu0 0.0
      %618 = vmatprep.subr.mxu0 0.0
      %619 = vmatpush1.msra.mxu0 0.0
      %620 = vmatprep.subr.mxu0 0.0
      %621 = vmatpush1.msra.mxu0 0.0
      %622 = vmatprep.subr.mxu0 0.0
      %623 = vmatpush1.msra.mxu0 0.0
      %624 = vmatprep.subr.mxu0 0.0
      %625 = vmatpush1.msra.mxu0 0.0
      %626 = vmatprep.subr.mxu0 0.0
      %627 = vmatpush1.msra.mxu0 0.0
      %628 = vmatprep.subr.mxu0 0.0
      %629 = vmatpush1.msra.mxu0 0.0
      %630 = vmatprep.subr.mxu0 0.0
      %631 = vmatpush1.msra.mxu0 0.0
      %632 = vmatprep.subr.mxu0 0.0
      %633 = vmatpush1.msra.mxu0 0.0
      %634 = vmatprep.subr.mxu0 0.0
      %635 = vmatpush1.msra.mxu0 0.0
      %636 = vmatprep.subr.mxu0 0.0
      %637 = vmatpush1.msra.mxu0 0.0
      %638 = vmatprep.subr.mxu0 0.0
      %639 = vmatpush1.msra.mxu0 0.0
      %640 = vmatprep.subr.mxu0 0.0
      %641 = vmatpush1.msra.mxu0 0.0
      %642 = vmatprep.subr.mxu0 0.0
      %643 = vmatpush1.msra.mxu0 0.0
      %644 = vmatprep.subr.mxu0 0.0
      %645 = vmatpush1.msra.mxu0 0.0
      %646 = vmatprep.subr.mxu0 0.0
      %647 = vmatpush1.msra.mxu0 0.0
      %648 = vmatprep.subr.mxu0 0.0
      %649 = vmatpush1.msra.mxu0 0.0
      %650 = vmatprep.subr.mxu0 0.0
      %651 = vmatpush1.msra.mxu0 0.0
      %652 = vmatprep.subr.mxu0 0.0
      %653 = vmatpush1.msra.mxu0 0.0
      %654 = vmatprep.subr.mxu0 0.0
      %655 = vmatpush1.msra.mxu0 0.0
      %656 = vmatprep.subr.mxu0 0.0
      %657 = vmatpush1.msra.mxu0 0.0
      %658 = vmatprep.subr.mxu0 0.0
      %659 = vmatpush1.msra.mxu0 0.0
      %660 = vmatprep.subr.mxu0 0.0
      %661 = vmatpush1.msra.mxu0 0.0
      %662 = vmatprep.subr.mxu0 0.0
      %663 = vmatpush1.msra.mxu0 0.0
      %664 = vmatprep.mubr.f32.mxu0 0.0
      %665 = vmatmul.mubr.f32.gmra.mrb[0].mxu0 %v598
      %v666 = vpop.f32.mrb[0].mxu0
      %v667 = vadd.f32 %v594, %v666
      %v668 = vpop.f32.mrb[0].mxu0
      %669 = vdwg.mxu0
      %v670 = vtanh.pop %v667
      %671 = vst.msk [vmem:[#allocation8] sm:$0x3] %vm498, %v670
      %v672 = vld [vmem:[#allocation7] sm:$0x3]
      %v673 = vsub.f32 %v672, %v504
      %v674 = vmul.f32 %v673, 1.442695
      %v675 = vpow.pop %v674
      %v676 = vmul.f32 %v675, %v507
      %v677 = vld [vmem:[#allocation6] sm:$0x3]
      %679 = vset.pattern.permute.xlu0 0
      %680 = vperm.xlu0 %679, %v676
      %v681 = vpop.permute.xlu0 %680
      %v683 = vmul.f32 %v677, %v681
      %684 = vst.msk [vmem:[#allocation10] sm:$0x3] %vm293, %v683
    $region25: #{tpu_custom_call.1} parent=1 // pred_fallthru
      _
    // Predicated region
    $region26: #{tpu_custom_call.1} parent=1 // pred_check
      _
    $region27: #{tpu_custom_call.1} parent=1 // pred_check_branch
      %686 = sbr.rel (0) target = $region29
    $region28: #{tpu_custom_call.1} parent=1 // pred_region
      %s688 = ssub.s32 32, 32
      %689 = vsyncadd [#allocation9], %s688
      %s691 = sshll.u32 [#allocation8], 4
      %s692 = int_to_ptr.vmem [resolvable:$true] %s691
      %694 = dma.vmem_to_hbm [thread:$0]  %s692, 32, %s4, [#allocation9]
    $region29: #{tpu_custom_call.1} parent=1 // pred_fallthru
      _
    // Predicated region
    $region30: #{tpu_custom_call.1} parent=1 // pred_check
      _
    $region31: #{tpu_custom_call.1} parent=1 // pred_check_branch
      %696 = sbr.rel (0) target = $region33
    $region32: #{tpu_custom_call.1} parent=1 // pred_region
      %s698 = ssub.s32 32, 32
      %699 = vsyncadd [#allocation11], %s698
      %s701 = sshll.u32 [#allocation10], 4
      %s702 = int_to_ptr.vmem [resolvable:$true] %s701
      %704 = dma.vmem_to_hbm [thread:$0]  %s702, 32, %s5, [#allocation11]
    $region33: #{tpu_custom_call.1} parent=1 // pred_fallthru
      _
    // Predicated region
    $region34: #{tpu_custom_call.1} parent=1 // pred_check
      _
    $region35: #{tpu_custom_call.1} parent=1 // pred_check_branch
      %706 = sbr.rel (0) target = $region37
    $region36: #{tpu_custom_call.1} parent=1 // pred_region
      %707 = dma.done [#allocation9], 32
    $region37: #{tpu_custom_call.1} parent=1 // pred_fallthru
      _
    // Predicated region
    $region38: #{tpu_custom_call.1} parent=1 // pred_check
      _
    $region39: #{tpu_custom_call.1} parent=1 // pred_check_branch
      %709 = sbr.rel (0) target = $region41
    $region40: #{tpu_custom_call.1} parent=1 // pred_region
      %710 = dma.done [#allocation11], 32
    $region41: #{tpu_custom_call.1} parent=1 // pred_fallthru
      _
    %711 = vsyncpa [#allocation9], 1
    %712 = vsyncpa [#allocation11], 1

// kernel: tpu_custom_call.1
$region0: #{tpu_custom_call.1}
  #allocation0 [shape = 'u32[]', space=smem, size = 0x4, offset = 0x4, fixed_abs, tag = 'smem constant byte address 0x4 - core index']
  #allocation1 [shape = 'u32[144,128]{1,0:T(1,128)}', space=vmem, size = 0x12000, scoped, tag = 'internal scratch']
  #allocation2 [shape = 'f32[2,32]{1,0:T(2,128)}', space=vmem, size = 0x400, scoped, tag = 'scratch operand']
  #allocation3 [shape = 'f32[2,1]{1,0:T(2,128)}', space=vmem, size = 0x400, scoped, tag = 'scratch operand']
  #allocation4 [shape = 'f32[2,1]{1,0:T(2,128)}', space=vmem, size = 0x400, scoped, tag = 'scratch operand']
  #allocation5 [shape = 'f32[2,32]{1,0:T(2,128)}', space=vmem, size = 0x400, scoped, tag = 'scratch operand']
  #allocation6 [shape = 'f32[1,2,8]{2,1,0:T(2,128)}', space=vmem, size = 0x400, scoped, tag = 'scratch operand']
  #allocation7 [shape = 'f32[1,2,1]{2,1,0:T(2,128)}', space=vmem, size = 0x400, scoped, tag = 'scratch operand']
  %s0 = inlined_call_operand.vmem [shape: f32[2,32], index: 0, kind: input, shape index: {}]
  %s1 = inlined_call_operand.vmem [shape: f32[2,8,32], index: 1, kind: input, shape index: {}]
  %s2 = inlined_call_operand.vmem [shape: f32[32,32], index: 2, kind: input, shape index: {}]
  %s3 = inlined_call_operand.vmem [shape: f32[64,32], index: 3, kind: input, shape index: {}]
  %s4 = inlined_call_operand.hbm [shape: f32[2,32], index: 4, kind: output, shape index: {0}]
  %s5 = inlined_call_operand.hbm [shape: f32[2,8], index: 5, kind: output, shape index: {1}]
  %6 = xla_tuple %s4, %s5
  %s7 = sld [smem:[#allocation0]]
  $region42: #{tpu_custom_call.1} parent=0
    _
  %s9 = ssub.s32 1, %s7
  %s10 = scalar_select 0, %s9, %s7
  $region1: #{tpu_custom_call.1} parent=0
    #allocation8 [shape = 'u8[1024]{0}', space=vmem, size = 0x400, scoped, tag = 'output window, operand 0, single buffered']
    #allocation9 [shape = 's32[1]{0}', space=sflag, size = 0x4, scoped, tag = 'scoped memory for tpu_custom_call.1']
    #allocation10 [shape = 'u8[1024]{0}', space=vmem, size = 0x400, scoped, tag = 'output window, operand 1, single buffered']
    #allocation11 [shape = 's32[1]{0}', space=sflag, size = 0x4, scoped, tag = 'scoped memory for tpu_custom_call.1']
    %11 = vsyncpa [#allocation9], 0
    %12 = vsyncpa [#allocation11], 0
    // Predicated region
    $region2: #{tpu_custom_call.1} parent=1 // pred_check
      _
    $region3: #{tpu_custom_call.1} parent=1 // pred_check_branch
      %14 = sbr.rel (0) target = $region5
    $region4: #{tpu_custom_call.1} parent=1 // pred_region
      _
    $region5: #{tpu_custom_call.1} parent=1 // pred_fallthru
      _
    // Predicated region
    $region6: #{tpu_custom_call.1} parent=1 // pred_check
      _
    $region7: #{tpu_custom_call.1} parent=1 // pred_check_branch
      %16 = sbr.rel (0) target = $region9
    $region8: #{tpu_custom_call.1} parent=1 // pred_region
      _
    $region9: #{tpu_custom_call.1} parent=1 // pred_fallthru
      _
    // Predicated region
    $region10: #{tpu_custom_call.1} parent=1 // pred_check
      _
    $region11: #{tpu_custom_call.1} parent=1 // pred_check_branch
      %18 = sbr.rel (0) target = $region13
    $region12: #{tpu_custom_call.1} parent=1 // pred_region
      _
    $region13: #{tpu_custom_call.1} parent=1 // pred_fallthru
      _
    // Predicated region
    $region14: #{tpu_custom_call.1} parent=1 // pred_check
      _
    $region15: #{tpu_custom_call.1} parent=1 // pred_check_branch
      %20 = sbr.rel (0) target = $region17
    $region16: #{tpu_custom_call.1} parent=1 // pred_region
      _
    $region17: #{tpu_custom_call.1} parent=1 // pred_fallthru
      _
    %v21 = vld [vmem:[%s1] sm:$0xff]
    %v22 = vld [vmem:[%s1 + $0x8] sm:$0xff]
    %p23 = scmp.eq.s32.totalorder 0, 0
    // Predicated region
    $region18: #{tpu_custom_call.1} parent=1 // pred_check
      %p24 = pneg %p23
    $region19: #{tpu_custom_call.1} parent=1 // pred_check_branch
      %26 = sbr.rel (%p24) target = $region21
    $region20: #{tpu_custom_call.1} parent=1 // pred_region
      %v27 = vld [vmem:[%s0] sm:$0x3]
      %v28 = vld [vmem:[%s2] sm:$0xff]
      %v29 = vld [vmem:[%s2 + $0x8] sm:$0xff]
      %v30 = vld [vmem:[%s2 + $0x10] sm:$0xff]
      %v31 = vld [vmem:[%s2 + $0x18] sm:$0xff]
      %vm32 = vcmask 261120
      %v34 = vsel %vm32, %v27, 0
      %36 = vmatprep.subr.mxu0 0.0
      %37 = vmatpush1.msra.mxu0 %v28
      %38 = vmatprep.subr.mxu0 0.0
      %39 = vmatpush1.msra.mxu0 %v29
      %40 = vmatprep.subr.mxu0 0.0
      %41 = vmatpush1.msra.mxu0 %v30
      %42 = vmatprep.subr.mxu0 0.0
      %43 = vmatpush1.msra.mxu0 %v31
      %44 = vmatprep.subr.mxu0 0.0
      %45 = vmatpush1.msra.mxu0 0.0
      %46 = vmatprep.subr.mxu0 0.0
      %47 = vmatpush1.msra.mxu0 0.0
      %48 = vmatprep.subr.mxu0 0.0
      %49 = vmatpush1.msra.mxu0 0.0
      %50 = vmatprep.subr.mxu0 0.0
      %51 = vmatpush1.msra.mxu0 0.0
      %52 = vmatprep.subr.mxu0 0.0
      %53 = vmatpush1.msra.mxu0 0.0
      %54 = vmatprep.subr.mxu0 0.0
      %55 = vmatpush1.msra.mxu0 0.0
      %56 = vmatprep.subr.mxu0 0.0
      %57 = vmatpush1.msra.mxu0 0.0
      %58 = vmatprep.subr.mxu0 0.0
      %59 = vmatpush1.msra.mxu0 0.0
      %60 = vmatprep.subr.mxu0 0.0
      %61 = vmatpush1.msra.mxu0 0.0
      %62 = vmatprep.subr.mxu0 0.0
      %63 = vmatpush1.msra.mxu0 0.0
      %64 = vmatprep.subr.mxu0 0.0
      %65 = vmatpush1.msra.mxu0 0.0
      %66 = vmatprep.subr.mxu0 0.0
      %67 = vmatpush1.msra.mxu0 0.0
      %68 = vmatprep.subr.mxu0 0.0
      %69 = vmatpush1.msra.mxu0 0.0
      %70 = vmatprep.subr.mxu0 0.0
      %71 = vmatpush1.msra.mxu0 0.0
      %72 = vmatprep.subr.mxu0 0.0
      %73 = vmatpush1.msra.mxu0 0.0
      %74 = vmatprep.subr.mxu0 0.0
      %75 = vmatpush1.msra.mxu0 0.0
      %76 = vmatprep.subr.mxu0 0.0
      %77 = vmatpush1.msra.mxu0 0.0
      %78 = vmatprep.subr.mxu0 0.0
      %79 = vmatpush1.msra.mxu0 0.0
      %80 = vmatprep.subr.mxu0 0.0
      %81 = vmatpush1.msra.mxu0 0.0
      %82 = vmatprep.subr.mxu0 0.0
      %83 = vmatpush1.msra.mxu0 0.0
      %84 = vmatprep.subr.mxu0 0.0
      %85 = vmatpush1.msra.mxu0 0.0
      %86 = vmatprep.subr.mxu0 0.0
      %87 = vmatpush1.msra.mxu0 0.0
      %88 = vmatprep.subr.mxu0 0.0
      %89 = vmatpush1.msra.mxu0 0.0
      %90 = vmatprep.subr.mxu0 0.0
      %91 = vmatpush1.msra.mxu0 0.0
      %92 = vmatprep.subr.mxu0 0.0
      %93 = vmatpush1.msra.mxu0 0.0
      %94 = vmatprep.subr.mxu0 0.0
      %95 = vmatpush1.msra.mxu0 0.0
      %96 = vmatprep.subr.mxu0 0.0
      %97 = vmatpush1.msra.mxu0 0.0
      %98 = vmatprep.subr.mxu0 0.0
      %99 = vmatpush1.msra.mxu0 0.0
      %100 = vmatprep.mubr.f32.mxu0 0.0
      %101 = vmatmul.mubr.f32.gmra.mrb[0].mxu0 %v34
      %v102 = vpop.f32.mrb[0].mxu0
      %v103 = vadd.f32 0.0, %v102
      %v104 = vpop.f32.mrb[0].mxu0
      %105 = vdwg.mxu0
      %vm106 = vcmask 254976
      %107 = vst.msk [vmem:[#allocation2] sm:$0x3] %vm106, %v103
      %vm108 = vcmask 1024
      %109 = vst.msk [vmem:[#allocation3] sm:$0x3] %vm108, -inf
      %110 = vst.msk [vmem:[#allocation4] sm:$0x3] %vm108, 0.0
      %111 = vst.msk [vmem:[#allocation5] sm:$0x3] %vm106, 0.0
    $region21: #{tpu_custom_call.1} parent=1 // pred_fallthru
      _
    %v112 = vld [vmem:[#allocation2] sm:$0x3]
    %v115 = vunpack.c.l.s4 1966171168
    %v116 = vunpack.c.0.s8 %v115
    %v117 = vlaneseq
    %v118 = vshrl.u32 %v117, 7
    %v119 = vsub.s32 %v116, %v118
    %v120 = vrot.slane %v112, %v119
    %v121 = vcombine.high %v120, %v120
    %v123 = vunpack.c.l.s4 1966171168
    %v124 = vunpack.c.0.s8 %v123
    %v125 = vlaneseq
    %v126 = vshrl.u32 %v125, 7
    %v127 = vsub.s32 %v124, %v126
    %v128 = vrot.slane %v120, %v127
    %v130 = vunpack.c.l.s4 1966171168
    %v131 = vunpack.c.0.s8 %v130
    %v132 = vlaneseq
    %v133 = vshrl.u32 %v132, 7
    %v134 = vsub.s32 %v131, %v133
    %v135 = vrot.slane %v121, %v134
    %vm136 = vcmask 261120
    %v137 = vsel %vm136, %v128, 0
    %v140 = vsel %vm136, %v21, 0
    %142 = vmatprep.subr.mxu0 0.0
    %143 = vmatpush1.xpose.msra.mxu0 %v140
    %144 = vmatprep.subr.mxu0 0.0
    %145 = vmatpush1.xpose.msra.mxu0 0.0
    %146 = vmatprep.subr.mxu0 0.0
    %147 = vmatpush1.xpose.msra.mxu0 0.0
    %148 = vmatprep.subr.mxu0 0.0
    %149 = vmatpush1.xpose.msra.mxu0 0.0
    %150 = vmatprep.subr.mxu0 0.0
    %151 = vmatpush1.xpose.msra.mxu0 0.0
    %152 = vmatprep.subr.mxu0 0.0
    %153 = vmatpush1.xpose.msra.mxu0 0.0
    %154 = vmatprep.subr.mxu0 0.0
    %155 = vmatpush1.xpose.msra.mxu0 0.0
    %156 = vmatprep.subr.mxu0 0.0
    %157 = vmatpush1.xpose.msra.mxu0 0.0
    %158 = vmatprep.subr.mxu0 0.0
    %159 = vmatpush1.xpose.msra.mxu0 0.0
    %160 = vmatprep.subr.mxu0 0.0
    %161 = vmatpush1.xpose.msra.mxu0 0.0
    %162 = vmatprep.subr.mxu0 0.0
    %163 = vmatpush1.xpose.msra.mxu0 0.0
    %164 = vmatprep.subr.mxu0 0.0
    %165 = vmatpush1.xpose.msra.mxu0 0.0
    %166 = vmatprep.subr.mxu0 0.0
    %167 = vmatpush1.xpose.msra.mxu0 0.0
    %168 = vmatprep.subr.mxu0 0.0
    %169 = vmatpush1.xpose.msra.mxu0 0.0
    %170 = vmatprep.subr.mxu0 0.0
    %171 = vmatpush1.xpose.msra.mxu0 0.0
    %172 = vmatprep.subr.mxu0 0.0
    %173 = vmatpush1.xpose.msra.mxu0 0.0
    %174 = vmatprep.subr.mxu0 0.0
    %175 = vmatpush1.xpose.msra.mxu0 0.0
    %176 = vmatprep.subr.mxu0 0.0
    %177 = vmatpush1.xpose.msra.mxu0 0.0
    %178 = vmatprep.subr.mxu0 0.0
    %179 = vmatpush1.xpose.msra.mxu0 0.0
    %180 = vmatprep.subr.mxu0 0.0
    %181 = vmatpush1.xpose.msra.mxu0 0.0
    %182 = vmatprep.subr.mxu0 0.0
    %183 = vmatpush1.xpose.msra.mxu0 0.0
    %184 = vmatprep.subr.mxu0 0.0
    %185 = vmatpush1.xpose.msra.mxu0 0.0
    %186 = vmatprep.subr.mxu0 0.0
    %187 = vmatpush1.xpose.msra.mxu0 0.0
    %188 = vmatprep.subr.mxu0 0.0
    %189 = vmatpush1.xpose.msra.mxu0 0.0
    %190 = vmatprep.subr.mxu0 0.0
    %191 = vmatpush1.xpose.msra.mxu0 0.0
    %192 = vmatprep.subr.mxu0 0.0
    %193 = vmatpush1.xpose.msra.mxu0 0.0
    %194 = vmatprep.subr.mxu0 0.0
    %195 = vmatpush1.xpose.msra.mxu0 0.0
    %196 = vmatprep.subr.mxu0 0.0
    %197 = vmatpush1.xpose.msra.mxu0 0.0
    %198 = vmatprep.subr.mxu0 0.0
    %199 = vmatpush1.xpose.msra.mxu0 0.0
    %200 = vmatprep.subr.mxu0 0.0
    %201 = vmatpush1.xpose.msra.mxu0 0.0
    %202 = vmatprep.subr.mxu0 0.0
    %203 = vmatpush1.xpose.msra.mxu0 0.0
    %204 = vmatprep.subr.mxu0 0.0
    %205 = vmatpush1.xpose.msra.mxu0 0.0
    %206 = vmatprep.mubr.f32.mxu0 0.0
    %207 = vmatmul.mubr.f32.gmra.mrb[0].mxu0 %v137
    %v208 = vpop.f32.mrb[0].mxu0
    %v209 = vadd.f32 0.0, %v208
    %v210 = vpop.f32.mrb[0].mxu0
    %211 = vdwg.mxu0
    %v212 = vsel %vm136, %v135, 0
    %v215 = vsel %vm136, %v22, 0
    %217 = vmatprep.subr.mxu0 0.0
    %218 = vmatpush1.xpose.msra.mxu0 %v215
    %219 = vmatprep.subr.mxu0 0.0
    %220 = vmatpush1.xpose.msra.mxu0 0.0
    %221 = vmatprep.subr.mxu0 0.0
    %222 = vmatpush1.xpose.msra.mxu0 0.0
    %223 = vmatprep.subr.mxu0 0.0
    %224 = vmatpush1.xpose.msra.mxu0 0.0
    %225 = vmatprep.subr.mxu0 0.0
    %226 = vmatpush1.xpose.msra.mxu0 0.0
    %227 = vmatprep.subr.mxu0 0.0
    %228 = vmatpush1.xpose.msra.mxu0 0.0
    %229 = vmatprep.subr.mxu0 0.0
    %230 = vmatpush1.xpose.msra.mxu0 0.0
    %231 = vmatprep.subr.mxu0 0.0
    %232 = vmatpush1.xpose.msra.mxu0 0.0
    %233 = vmatprep.subr.mxu0 0.0
    %234 = vmatpush1.xpose.msra.mxu0 0.0
    %235 = vmatprep.subr.mxu0 0.0
    %236 = vmatpush1.xpose.msra.mxu0 0.0
    %237 = vmatprep.subr.mxu0 0.0
    %238 = vmatpush1.xpose.msra.mxu0 0.0
    %239 = vmatprep.subr.mxu0 0.0
    %240 = vmatpush1.xpose.msra.mxu0 0.0
    %241 = vmatprep.subr.mxu0 0.0
    %242 = vmatpush1.xpose.msra.mxu0 0.0
    %243 = vmatprep.subr.mxu0 0.0
    %244 = vmatpush1.xpose.msra.mxu0 0.0
    %245 = vmatprep.subr.mxu0 0.0
    %246 = vmatpush1.xpose.msra.mxu0 0.0
    %247 = vmatprep.subr.mxu0 0.0
    %248 = vmatpush1.xpose.msra.mxu0 0.0
    %249 = vmatprep.subr.mxu0 0.0
    %250 = vmatpush1.xpose.msra.mxu0 0.0
    %251 = vmatprep.subr.mxu0 0.0
    %252 = vmatpush1.xpose.msra.mxu0 0.0
    %253 = vmatprep.subr.mxu0 0.0
    %254 = vmatpush1.xpose.msra.mxu0 0.0
    %255 = vmatprep.subr.mxu0 0.0
    %256 = vmatpush1.xpose.msra.mxu0 0.0
    %257 = vmatprep.subr.mxu0 0.0
    %258 = vmatpush1.xpose.msra.mxu0 0.0
    %259 = vmatprep.subr.mxu0 0.0
    %260 = vmatpush1.xpose.msra.mxu0 0.0
    %261 = vmatprep.subr.mxu0 0.0
    %262 = vmatpush1.xpose.msra.mxu0 0.0
    %263 = vmatprep.subr.mxu0 0.0
    %264 = vmatpush1.xpose.msra.mxu0 0.0
    %265 = vmatprep.subr.mxu0 0.0
    %266 = vmatpush1.xpose.msra.mxu0 0.0
    %267 = vmatprep.subr.mxu0 0.0
    %268 = vmatpush1.xpose.msra.mxu0 0.0
    %269 = vmatprep.subr.mxu0 0.0
    %270 = vmatpush1.xpose.msra.mxu0 0.0
    %271 = vmatprep.subr.mxu0 0.0
    %272 = vmatpush1.xpose.msra.mxu0 0.0
    %273 = vmatprep.subr.mxu0 0.0
    %274 = vmatpush1.xpose.msra.mxu0 0.0
    %275 = vmatprep.subr.mxu0 0.0
    %276 = vmatpush1.xpose.msra.mxu0 0.0
    %277 = vmatprep.subr.mxu0 0.0
    %278 = vmatpush1.xpose.msra.mxu0 0.0
    %279 = vmatprep.subr.mxu0 0.0
    %280 = vmatpush1.xpose.msra.mxu0 0.0
    %281 = vmatprep.mubr.f32.mxu0 0.0
    %282 = vmatmul.mubr.f32.gmra.mrb[0].mxu0 %v212
    %v283 = vpop.f32.mrb[0].mxu0
    %v284 = vadd.f32 0.0, %v283
    %v285 = vpop.f32.mrb[0].mxu0
    %286 = vdwg.mxu0
    %v289 = vrot.slane %v284, 7
    %vm290 = vcmask 1041409
    %v291 = vsel %vm290, %v289, %v209
    %vm293 = vcmask 58368
    %v294 = vsel %vm293, %v291, -inf
    %295 = vmax.xlane.f32.xlu0 %v294
    %v296 = vpop.xlane.xlu0 %295
    %v298 = vrot.slane %v296, 1
    %v301 = vsub.f32 %v209, %v296
    %v302 = vsub.f32 %v284, %v298
    %v303 = vmul.f32 %v301, 1.442695
    %v304 = vpow.pop %v303
    %v305 = vmul.f32 %v302, 1.442695
    %v306 = vpow.pop %v305
    %v309 = vrot.slane %v306, 7
    %v310 = vsel %vm290, %v309, %v304
    %s312 = smul.u32 0, 2
    %s313 = scalar_lea.vmem [#allocation6], %s312
    %314 = vst.msk [vmem:[%s313] sm:$0x3] %vm293, %v310
    %s315 = scalar_lea.vmem [#allocation7], %s312
    %vm316 = vcmask 1024
    %317 = vst.msk [vmem:[%s315] sm:$0x3] %vm316, %v296
    %v318 = vld [vmem:[#allocation3] sm:$0x3]
    %v319 = vmax.f32 %v318, %v296
    %v320 = vsub.f32 %v318, %v319
    %v321 = vmul.f32 %v320, 1.442695
    %v322 = vpow.pop %v321
    %v323 = vsub.f32 %v296, %v319
    %v324 = vmul.f32 %v323, 1.442695
    %v325 = vpow.pop %v324
    %v326 = vld [vmem:[#allocation4] sm:$0x3]
    %v327 = vmul.f32 %v322, %v326
    %v328 = vsel %vm293, %v310, 0.0
    %329 = vadd.xlane.f32.xlu0 %v328
    %v330 = vpop.xlane.xlu0 %329
    %v331 = vmul.f32 %v325, %v330
    %v332 = vadd.f32 %v327, %v331
    %333 = vst.msk [vmem:[#allocation4] sm:$0x3] %vm316, %v332
    %vm334 = vcmask 64512
    %v335 = vsel %vm334, %v304, 0
    %337 = vmatprep.subr.mxu0 0.0
    %338 = vmatpush1.msra.mxu0 %v21
    %339 = vmatprep.subr.mxu0 0.0
    %340 = vmatpush1.msra.mxu0 0.0
    %341 = vmatprep.subr.mxu0 0.0
    %342 = vmatpush1.msra.mxu0 0.0
    %343 = vmatprep.subr.mxu0 0.0
    %344 = vmatpush1.msra.mxu0 0.0
    %345 = vmatprep.subr.mxu0 0.0
    %346 = vmatpush1.msra.mxu0 0.0
    %347 = vmatprep.subr.mxu0 0.0
    %348 = vmatpush1.msra.mxu0 0.0
    %349 = vmatprep.subr.mxu0 0.0
    %350 = vmatpush1.msra.mxu0 0.0
    %351 = vmatprep.subr.mxu0 0.0
    %352 = vmatpush1.msra.mxu0 0.0
    %353 = vmatprep.subr.mxu0 0.0
    %354 = vmatpush1.msra.mxu0 0.0
    %355 = vmatprep.subr.mxu0 0.0
    %356 = vmatpush1.msra.mxu0 0.0
    %357 = vmatprep.subr.mxu0 0.0
    %358 = vmatpush1.msra.mxu0 0.0
    %359 = vmatprep.subr.mxu0 0.0
    %360 = vmatpush1.msra.mxu0 0.0
    %361 = vmatprep.subr.mxu0 0.0
    %362 = vmatpush1.msra.mxu0 0.0
    %363 = vmatprep.subr.mxu0 0.0
    %364 = vmatpush1.msra.mxu0 0.0
    %365 = vmatprep.subr.mxu0 0.0
    %366 = vmatpush1.msra.mxu0 0.0
    %367 = vmatprep.subr.mxu0 0.0
    %368 = vmatpush1.msra.mxu0 0.0
    %369 = vmatprep.subr.mxu0 0.0
    %370 = vmatpush1.msra.mxu0 0.0
    %371 = vmatprep.subr.mxu0 0.0
    %372 = vmatpush1.msra.mxu0 0.0
    %373 = vmatprep.subr.mxu0 0.0
    %374 = vmatpush1.msra.mxu0 0.0
    %375 = vmatprep.subr.mxu0 0.0
    %376 = vmatpush1.msra.mxu0 0.0
    %377 = vmatprep.subr.mxu0 0.0
    %378 = vmatpush1.msra.mxu0 0.0
    %379 = vmatprep.subr.mxu0 0.0
    %380 = vmatpush1.msra.mxu0 0.0
    %381 = vmatprep.subr.mxu0 0.0
    %382 = vmatpush1.msra.mxu0 0.0
    %383 = vmatprep.subr.mxu0 0.0
    %384 = vmatpush1.msra.mxu0 0.0
    %385 = vmatprep.subr.mxu0 0.0
    %386 = vmatpush1.msra.mxu0 0.0
    %387 = vmatprep.subr.mxu0 0.0
    %388 = vmatpush1.msra.mxu0 0.0
    %389 = vmatprep.subr.mxu0 0.0
    %390 = vmatpush1.msra.mxu0 0.0
    %391 = vmatprep.subr.mxu0 0.0
    %392 = vmatpush1.msra.mxu0 0.0
    %393 = vmatprep.subr.mxu0 0.0
    %394 = vmatpush1.msra.mxu0 0.0
    %395 = vmatprep.subr.mxu0 0.0
    %396 = vmatpush1.msra.mxu0 0.0
    %397 = vmatprep.subr.mxu0 0.0
    %398 = vmatpush1.msra.mxu0 0.0
    %399 = vmatprep.subr.mxu0 0.0
    %400 = vmatpush1.msra.mxu0 0.0
    %401 = vmatprep.mubr.f32.mxu0 0.0
    %402 = vmatmul.mubr.f32.gmra.mrb[0].mxu0 %v335
    %v403 = vpop.f32.mrb[0].mxu0
    %v404 = vadd.f32 0.0, %v403
    %v405 = vpop.f32.mrb[0].mxu0
    %406 = vdwg.mxu0
    %v407 = vsel %vm334, %v306, 0
    %409 = vmatprep.subr.mxu0 0.0
    %410 = vmatpush1.msra.mxu0 %v22
    %411 = vmatprep.subr.mxu0 0.0
    %412 = vmatpush1.msra.mxu0 0.0
    %413 = vmatprep.subr.mxu0 0.0
    %414 = vmatpush1.msra.mxu0 0.0
    %415 = vmatprep.subr.mxu0 0.0
    %416 = vmatpush1.msra.mxu0 0.0
    %417 = vmatprep.subr.mxu0 0.0
    %418 = vmatpush1.msra.mxu0 0.0
    %419 = vmatprep.subr.mxu0 0.0
    %420 = vmatpush1.msra.mxu0 0.0
    %421 = vmatprep.subr.mxu0 0.0
    %422 = vmatpush1.msra.mxu0 0.0
    %423 = vmatprep.subr.mxu0 0.0
    %424 = vmatpush1.msra.mxu0 0.0
    %425 = vmatprep.subr.mxu0 0.0
    %426 = vmatpush1.msra.mxu0 0.0
    %427 = vmatprep.subr.mxu0 0.0
    %428 = vmatpush1.msra.mxu0 0.0
    %429 = vmatprep.subr.mxu0 0.0
    %430 = vmatpush1.msra.mxu0 0.0
    %431 = vmatprep.subr.mxu0 0.0
    %432 = vmatpush1.msra.mxu0 0.0
    %433 = vmatprep.subr.mxu0 0.0
    %434 = vmatpush1.msra.mxu0 0.0
    %435 = vmatprep.subr.mxu0 0.0
    %436 = vmatpush1.msra.mxu0 0.0
    %437 = vmatprep.subr.mxu0 0.0
    %438 = vmatpush1.msra.mxu0 0.0
    %439 = vmatprep.subr.mxu0 0.0
    %440 = vmatpush1.msra.mxu0 0.0
    %441 = vmatprep.subr.mxu0 0.0
    %442 = vmatpush1.msra.mxu0 0.0
    %443 = vmatprep.subr.mxu0 0.0
    %444 = vmatpush1.msra.mxu0 0.0
    %445 = vmatprep.subr.mxu0 0.0
    %446 = vmatpush1.msra.mxu0 0.0
    %447 = vmatprep.subr.mxu0 0.0
    %448 = vmatpush1.msra.mxu0 0.0
    %449 = vmatprep.subr.mxu0 0.0
    %450 = vmatpush1.msra.mxu0 0.0
    %451 = vmatprep.subr.mxu0 0.0
    %452 = vmatpush1.msra.mxu0 0.0
    %453 = vmatprep.subr.mxu0 0.0
    %454 = vmatpush1.msra.mxu0 0.0
    %455 = vmatprep.subr.mxu0 0.0
    %456 = vmatpush1.msra.mxu0 0.0
    %457 = vmatprep.subr.mxu0 0.0
    %458 = vmatpush1.msra.mxu0 0.0
    %459 = vmatprep.subr.mxu0 0.0
    %460 = vmatpush1.msra.mxu0 0.0
    %461 = vmatprep.subr.mxu0 0.0
    %462 = vmatpush1.msra.mxu0 0.0
    %463 = vmatprep.subr.mxu0 0.0
    %464 = vmatpush1.msra.mxu0 0.0
    %465 = vmatprep.subr.mxu0 0.0
    %466 = vmatpush1.msra.mxu0 0.0
    %467 = vmatprep.subr.mxu0 0.0
    %468 = vmatpush1.msra.mxu0 0.0
    %469 = vmatprep.subr.mxu0 0.0
    %470 = vmatpush1.msra.mxu0 0.0
    %471 = vmatprep.subr.mxu0 0.0
    %472 = vmatpush1.msra.mxu0 0.0
    %473 = vmatprep.mubr.f32.mxu0 0.0
    %474 = vmatmul.mubr.f32.gmra.mrb[0].mxu0 %v407
    %v475 = vpop.f32.mrb[0].mxu0
    %v476 = vadd.f32 0.0, %v475
    %v477 = vpop.f32.mrb[0].mxu0
    %478 = vdwg.mxu0
    %v479 = vld [vmem:[#allocation5] sm:$0x3]
    %481 = vset.pattern.permute.xlu0 0
    %482 = vperm.xlu0 %481, %v322
    %v483 = vpop.permute.xlu0 %482
    %v485 = vmul.f32 %v483, %v479
    %487 = vset.pattern.permute.xlu0 0
    %488 = vperm.xlu0 %487, %v325
    %v489 = vpop.permute.xlu0 %488
    %v493 = vrot.slane %v476, 7
    %v494 = vsel %vm290, %v493, %v404
    %v496 = vmul.f32 %v489, %v494
    %v497 = vadd.f32 %v485, %v496
    %vm498 = vcmask 254976
    %499 = vst.msk [vmem:[#allocation5] sm:$0x3] %vm498, %v497
    %500 = vst.msk [vmem:[#allocation3] sm:$0x3] %vm316, %v319
    // Predicated region
    $region22: #{tpu_custom_call.1} parent=1 // pred_check
      %p501 = pneg %p23
    $region23: #{tpu_custom_call.1} parent=1 // pred_check_branch
      %503 = sbr.rel (%p501) target = $region25
    $region24: #{tpu_custom_call.1} parent=1 // pred_region
      %v504 = vld [vmem:[#allocation3] sm:$0x3]
      %v505 = vld [vmem:[#allocation4] sm:$0x3]
      %v506 = vrcp.pop %v505
      %v507 = vmul.f32 1.0, %v506
      %v508 = vld [vmem:[#allocation5] sm:$0x3]
      %510 = vset.pattern.permute.xlu0 0
      %511 = vperm.xlu0 %510, %v507
      %v512 = vpop.permute.xlu0 %511
      %v514 = vmul.f32 %v508, %v512
      %v515 = vld [vmem:[%s3] sm:$0xff]
      %v516 = vld [vmem:[%s3 + $0x8] sm:$0xff]
      %v517 = vld [vmem:[%s3 + $0x10] sm:$0xff]
      %v518 = vld [vmem:[%s3 + $0x18] sm:$0xff]
      %v519 = vld [vmem:[%s3 + $0x20] sm:$0xff]
      %v520 = vld [vmem:[%s3 + $0x28] sm:$0xff]
      %v521 = vld [vmem:[%s3 + $0x30] sm:$0xff]
      %v522 = vld [vmem:[%s3 + $0x38] sm:$0xff]
      %v523 = vld [vmem:[%s0] sm:$0x3]
      %v525 = vsel %vm136, %v523, 0
      %527 = vmatprep.subr.mxu0 0.0
      %528 = vmatpush1.msra.mxu0 %v519
      %529 = vmatprep.subr.mxu0 0.0
      %530 = vmatpush1.msra.mxu0 %v520
      %531 = vmatprep.subr.mxu0 0.0
      %532 = vmatpush1.msra.mxu0 %v521
      %533 = vmatprep.subr.mxu0 0.0
      %534 = vmatpush1.msra.mxu0 %v522
      %535 = vmatprep.subr.mxu0 0.0
      %536 = vmatpush1.msra.mxu0 0.0
      %537 = vmatprep.subr.mxu0 0.0
      %538 = vmatpush1.msra.mxu0 0.0
      %539 = vmatprep.subr.mxu0 0.0
      %540 = vmatpush1.msra.mxu0 0.0
      %541 = vmatprep.subr.mxu0 0.0
      %542 = vmatpush1.msra.mxu0 0.0
      %543 = vmatprep.subr.mxu0 0.0
      %544 = vmatpush1.msra.mxu0 0.0
      %545 = vmatprep.subr.mxu0 0.0
      %546 = vmatpush1.msra.mxu0 0.0
      %547 = vmatprep.subr.mxu0 0.0
      %548 = vmatpush1.msra.mxu0 0.0
      %549 = vmatprep.subr.mxu0 0.0
      %550 = vmatpush1.msra.mxu0 0.0
      %551 = vmatprep.subr.mxu0 0.0
      %552 = vmatpush1.msra.mxu0 0.0
      %553 = vmatprep.subr.mxu0 0.0
      %554 = vmatpush1.msra.mxu0 0.0
      %555 = vmatprep.subr.mxu0 0.0
      %556 = vmatpush1.msra.mxu0 0.0
      %557 = vmatprep.subr.mxu0 0.0
      %558 = vmatpush1.msra.mxu0 0.0
      %559 = vmatprep.subr.mxu0 0.0
      %560 = vmatpush1.msra.mxu0 0.0
      %561 = vmatprep.subr.mxu0 0.0
      %562 = vmatpush1.msra.mxu0 0.0
      %563 = vmatprep.subr.mxu0 0.0
      %564 = vmatpush1.msra.mxu0 0.0
      %565 = vmatprep.subr.mxu0 0.0
      %566 = vmatpush1.msra.mxu0 0.0
      %567 = vmatprep.subr.mxu0 0.0
      %568 = vmatpush1.msra.mxu0 0.0
      %569 = vmatprep.subr.mxu0 0.0
      %570 = vmatpush1.msra.mxu0 0.0
      %571 = vmatprep.subr.mxu0 0.0
      %572 = vmatpush1.msra.mxu0 0.0
      %573 = vmatprep.subr.mxu0 0.0
      %574 = vmatpush1.msra.mxu0 0.0
      %575 = vmatprep.subr.mxu0 0.0
      %576 = vmatpush1.msra.mxu0 0.0
      %577 = vmatprep.subr.mxu0 0.0
      %578 = vmatpush1.msra.mxu0 0.0
      %579 = vmatprep.subr.mxu0 0.0
      %580 = vmatpush1.msra.mxu0 0.0
      %581 = vmatprep.subr.mxu0 0.0
      %582 = vmatpush1.msra.mxu0 0.0
      %583 = vmatprep.subr.mxu0 0.0
      %584 = vmatpush1.msra.mxu0 0.0
      %585 = vmatprep.subr.mxu0 0.0
      %586 = vmatpush1.msra.mxu0 0.0
      %587 = vmatprep.subr.mxu0 0.0
      %588 = vmatpush1.msra.mxu0 0.0
      %589 = vmatprep.subr.mxu0 0.0
      %590 = vmatpush1.msra.mxu0 0.0
      %591 = vmatprep.mubr.f32.mxu0 0.0
      %592 = vmatmul.mubr.f32.gmra.mrb[0].mxu0 %v525
      %v593 = vpop.f32.mrb[0].mxu0
      %v594 = vadd.f32 0.0, %v593
      %v595 = vpop.f32.mrb[0].mxu0
      %596 = vdwg.mxu0
      %v598 = vsel %vm136, %v514, 0
      %600 = vmatprep.subr.mxu0 0.0
      %601 = vmatpush1.msra.mxu0 %v515
      %602 = vmatprep.subr.mxu0 0.0
      %603 = vmatpush1.msra.mxu0 %v516
      %604 = vmatprep.subr.mxu0 0.0
      %605 = vmatpush1.msra.mxu0 %v517
      %606 = vmatprep.subr.mxu0 0.0
      %607 = vmatpush1.msra.mxu0 %v518
      %608 = vmatprep.subr.mxu0 0.0
      %609 = vmatpush1.msra.mxu0 0.0
      %610 = vmatprep.subr.mxu0 0.0
      %611 = vmatpush1.msra.mxu0 0.0
      %612 = vmatprep.subr.mxu0 0.0
      %613 = vmatpush1.msra.mxu0 0.0
      %614 = vmatprep.subr.mxu0 0.0
      %615 = vmatpush1.msra.mxu0 0.0
      %616 = vmatprep.subr.mxu0 0.0
      %617 = vmatpush1.msra.mxu0 0.0
      %618 = vmatprep.subr.mxu0 0.0
      %619 = vmatpush1.msra.mxu0 0.0
      %620 = vmatprep.subr.mxu0 0.0
      %621 = vmatpush1.msra.mxu0 0.0
      %622 = vmatprep.subr.mxu0 0.0
      %623 = vmatpush1.msra.mxu0 0.0
      %624 = vmatprep.subr.mxu0 0.0
      %625 = vmatpush1.msra.mxu0 0.0
      %626 = vmatprep.subr.mxu0 0.0
      %627 = vmatpush1.msra.mxu0 0.0
      %628 = vmatprep.subr.mxu0 0.0
      %629 = vmatpush1.msra.mxu0 0.0
      %630 = vmatprep.subr.mxu0 0.0
      %631 = vmatpush1.msra.mxu0 0.0
      %632 = vmatprep.subr.mxu0 0.0
      %633 = vmatpush1.msra.mxu0 0.0
      %634 = vmatprep.subr.mxu0 0.0
      %635 = vmatpush1.msra.mxu0 0.0
      %636 = vmatprep.subr.mxu0 0.0
      %637 = vmatpush1.msra.mxu0 0.0
      %638 = vmatprep.subr.mxu0 0.0
      %639 = vmatpush1.msra.mxu0 0.0
      %640 = vmatprep.subr.mxu0 0.0
      %641 = vmatpush1.msra.mxu0 0.0
      %642 = vmatprep.subr.mxu0 0.0
      %643 = vmatpush1.msra.mxu0 0.0
      %644 = vmatprep.subr.mxu0 0.0
      %645 = vmatpush1.msra.mxu0 0.0
      %646 = vmatprep.subr.mxu0 0.0
      %647 = vmatpush1.msra.mxu0 0.0
      %648 = vmatprep.subr.mxu0 0.0
      %649 = vmatpush1.msra.mxu0 0.0
      %650 = vmatprep.subr.mxu0 0.0
      %651 = vmatpush1.msra.mxu0 0.0
      %652 = vmatprep.subr.mxu0 0.0
      %653 = vmatpush1.msra.mxu0 0.0
      %654 = vmatprep.subr.mxu0 0.0
      %655 = vmatpush1.msra.mxu0 0.0
      %656 = vmatprep.subr.mxu0 0.0
      %657 = vmatpush1.msra.mxu0 0.0
      %658 = vmatprep.subr.mxu0 0.0
      %659 = vmatpush1.msra.mxu0 0.0
      %660 = vmatprep.subr.mxu0 0.0
      %661 = vmatpush1.msra.mxu0 0.0
      %662 = vmatprep.subr.mxu0 0.0
      %663 = vmatpush1.msra.mxu0 0.0
      %664 = vmatprep.mubr.f32.mxu0 0.0
      %665 = vmatmul.mubr.f32.gmra.mrb[0].mxu0 %v598
      %v666 = vpop.f32.mrb[0].mxu0
      %v667 = vadd.f32 %v594, %v666
      %v668 = vpop.f32.mrb[0].mxu0
      %669 = vdwg.mxu0
      %v670 = vtanh.pop %v667
      %671 = vst.msk [vmem:[#allocation8] sm:$0x3] %vm498, %v670
      %v672 = vld [vmem:[#allocation7] sm:$0x3]
      %v673 = vsub.f32 %v672, %v504
      %v674 = vmul.f32 %v673, 1.442695
      %v675 = vpow.pop %v674
      %v676 = vmul.f32 %v675, %v507
      %v677 = vld [vmem:[#allocation6] sm:$0x3]
      %679 = vset.pattern.permute.xlu0 0
      %680 = vperm.xlu0 %679, %v676
      %v681 = vpop.permute.xlu0 %680
      %v683 = vmul.f32 %v677, %v681
      %684 = vst.msk [vmem:[#allocation10] sm:$0x3] %vm293, %v683
    $region25: #{tpu_custom_call.1} parent=1 // pred_fallthru
      _
    // Predicated region
    $region26: #{tpu_custom_call.1} parent=1 // pred_check
      _
    $region27: #{tpu_custom_call.1} parent=1 // pred_check_branch
      %686 = sbr.rel (0) target = $region29
    $region28: #{tpu_custom_call.1} parent=1 // pred_region
      %s688 = ssub.s32 32, 32
      %689 = vsyncadd [#allocation9], %s688
      %s691 = sshll.u32 [#allocation8], 4
      %s692 = int_to_ptr.vmem [resolvable:$true] %s691
      %694 = dma.vmem_to_hbm [thread:$0]  %s692, 32, %s4, [#allocation9]
    $region29: #{tpu_custom_call.1} parent=1 // pred_fallthru
      _
    // Predicated region
    $region30: #{tpu_custom_call.1} parent=1 // pred_check
      _
    $region31: #{tpu_custom_call.1} parent=1 // pred_check_branch
      %696 = sbr.rel (0) target = $region33
    $region32: #{tpu_custom_call.1} parent=1 // pred_region
      %s698 = ssub.s32 32, 32
      %699 = vsyncadd [#allocation11], %s698
      %s701 = sshll.u32 [#allocation10], 4
      %s702 = int_to_ptr.vmem [resolvable:$true] %s701
      %704 = dma.vmem_to_hbm [thread:$0]  %s702, 32, %s5, [#allocation11]
    $region33: #{tpu_custom_call.1} parent=1 // pred_fallthru
      _
    // Predicated region
    $region34: #{tpu_custom_call.1} parent=1 // pred_check
      _
    $region35: #{tpu_custom_call.1} parent=1 // pred_check_branch
      %706 = sbr.rel (0) target = $region37
    $region36: #{tpu_custom_call.1} parent=1 // pred_region
      %707 = dma.done [#allocation9], 32
    $region37: #{tpu_custom_call.1} parent=1 // pred_fallthru
      _
    // Predicated region
    $region38: #{tpu_custom_call.1} parent=1 // pred_check
      _
    $region39: #{tpu_custom_call.1} parent=1 // pred_check_branch
      %709 = sbr.rel (0) target = $region41
    $region40: #{tpu_custom_call.1} parent=1 // pred_region
      %710 = dma.done [#allocation11], 32
    $region41: #{tpu_custom_call.1} parent=1 // pred_fallthru
      _
    %711 = vsyncpa [#allocation9], 1
    %712 = vsyncpa [#allocation11], 1

</llo_original>
